<compile_context>
chip_gen: v6e
topology: v6e:2x2x1
jax: 0.10.0
libtpu: 0.0.40
codegen_flags: <defaults>
</compile_context>

<pallas_src>
import functools

import numpy as np

import jax
import jax.numpy as jnp
from jax import lax
from jax.experimental import pallas as pl
from jax.experimental.pallas import tpu as pltpu

LANE = 128       # lane width: last dims padded to a multiple of this
SUBLANE = 8      # sublane width: batch padded to a multiple of this
MAX_TILE_V = 2048  # fc_out vocab tile (keeps 2 bf16 buffers of (Hp, TILE_V) small)


def _round_up(n, m):
    return ((n + m - 1) // m) * m


# --------------------------------------------------------------------------------------
# Fused decoder-step kernel.
#   grid = (L + num_vocab_tiles,)
#     s <  L : LSTM layer s (streamed merged weights, state carried in scratch/outputs)
#     s >= L : fc_out vocab tile (s - L)
# --------------------------------------------------------------------------------------
def _decoder_step_kernel(tokens_ref,                       # SMEM scalar prefetch (B,)
                         emb_ref,                          # HBM (V, Ep) f32
                         h_in_ref, c_in_ref,               # VMEM (L, Bp, Hp) f32
                         w_ref,                            # VMEM (1, in_p+Hp, 4*Hp) bf16
                         b_ref,                            # VMEM (1, 1, 4*Hp) f32
                         fc_w_ref,                         # VMEM (Hp, TILE_V) bf16
                         fc_b_ref,                         # VMEM (1, TILE_V) f32
                         pred_ref,                         # VMEM (Bp, TILE_V) f32
                         h_out_ref, c_out_ref,             # VMEM (L, Bp, Hp) f32
                         lhs_ref,                          # scratch (Bp, in_p+Hp) bf16
                         xg_ref,                           # scratch (Bp, Ep) f32
                         gather_sem,                       # DMA sems (B,)
                         *, num_layers, hidden_pad, embed_pad, in_max_pad,
                         batch, batch_pad):
    L = num_layers
    Hp = hidden_pad
    Ep = embed_pad
    s = pl.program_id(0)

    # ---- grid step 0: zero the LHS scratch and DMA-gather the B embedding rows ----
    @pl.when(s == 0)
    def _():
        lhs_ref[...] = jnp.zeros_like(lhs_ref)
        copies = [
            pltpu.make_async_copy(
                emb_ref.at[pl.ds(tokens_ref[b], 1)],       # (1, Ep) HBM row
                xg_ref.at[pl.ds(b, 1)],                    # (1, Ep) VMEM row
                gather_sem.at[b])
            for b in range(batch)
        ]
        for cp in copies:
            cp.start()
        for cp in copies:
            cp.wait()
        x = xg_ref[...]                                    # (Bp, Ep) f32
        if batch_pad > batch:                              # zero padded batch rows
            row = lax.broadcasted_iota(jnp.int32, (batch_pad, Ep), 0)
            x = jnp.where(row < batch, x, jnp.zeros_like(x))
        lhs_ref[:, 0:Ep] = x.astype(jnp.bfloat16)

    # ---- grid steps 0..L-1: one LSTM layer per step (merged [w_ih ; w_hh] matmul) ----
    @pl.when(s < L)
    def _():
        l = s
        # LHS = [ x | h_prev ]; x was written by the previous step (or the gather).
        lhs_ref[:, in_max_pad:] = h_in_ref[l].astype(jnp.bfloat16)

        gates = (jnp.dot(lhs_ref[...], w_ref[0],
                         preferred_element_type=jnp.float32)
                 + b_ref[0])                               # (Bp, 4*Hp) f32

        # PyTorch gate order: i, f, g, o. Hp multiple of 128 -> lane-aligned slices.
        i_g = jax.nn.sigmoid(gates[:, 0 * Hp:1 * Hp])
        f_g = jax.nn.sigmoid(gates[:, 1 * Hp:2 * Hp])
        g_g = jnp.tanh(gates[:, 2 * Hp:3 * Hp])
        o_g = jax.nn.sigmoid(gates[:, 3 * Hp:4 * Hp])

        c_new = f_g * c_in_ref[l] + i_g * g_g
        h_new = o_g * jnp.tanh(c_new)

        h_out_ref[l] = h_new
        c_out_ref[l] = c_new

        # Inter-layer dropout = identity.  h_new becomes the next layer's (and fc's) x.
        lhs_ref[:, 0:Hp] = h_new.astype(jnp.bfloat16)
        if in_max_pad > Hp:                                # clear stale embedding lanes
            lhs_ref[:, Hp:in_max_pad] = jnp.zeros(
                (batch_pad, in_max_pad - Hp), jnp.bfloat16)

    # ---- grid steps L..L+num_v-1: one fc_out vocab tile per step ----
    @pl.when(s >= L)
    def _():
        x = lhs_ref[:, 0:Hp]                               # final-layer h (bf16)
        pred_ref[...] = (jnp.dot(x, fc_w_ref[...],
                                 preferred_element_type=jnp.float32)
                         + fc_b_ref[...])


# --------------------------------------------------------------------------------------
# Parameter init (PyTorch layout / semantics).
# --------------------------------------------------------------------------------------
def init_decoder_params(key, output_dim, embed_dim, hidden_dim, num_layers):
    """nn.Embedding + nn.LSTM + nn.Linear shaped parameters (f32, PyTorch layout)."""
    params = {}
    key, k_emb, k_fcw, k_fcb = jax.random.split(key, 4)
    params["embedding"] = jax.random.normal(
        k_emb, (output_dim, embed_dim), dtype=jnp.float32)

    bound = 1.0 / float(np.sqrt(hidden_dim))
    layers = []
    for layer in range(num_layers):
        in_size = embed_dim if layer == 0 else hidden_dim
        key, k1, k2, k3, k4 = jax.random.split(key, 5)
        layers.append({
            "w_ih": jax.random.uniform(k1, (4 * hidden_dim, in_size),
                                       minval=-bound, maxval=bound, dtype=jnp.float32),
            "w_hh": jax.random.uniform(k2, (4 * hidden_dim, hidden_dim),
                                       minval=-bound, maxval=bound, dtype=jnp.float32),
            "b_ih": jax.random.uniform(k3, (4 * hidden_dim,),
                                       minval=-bound, maxval=bound, dtype=jnp.float32),
            "b_hh": jax.random.uniform(k4, (4 * hidden_dim,),
                                       minval=-bound, maxval=bound, dtype=jnp.float32),
        })
    params["lstm"] = layers
    params["fc_w"] = jax.random.uniform(k_fcw, (output_dim, hidden_dim),
                                        minval=-bound, maxval=bound, dtype=jnp.float32)
    params["fc_b"] = jax.random.uniform(k_fcb, (output_dim,),
                                        minval=-bound, maxval=bound, dtype=jnp.float32)
    return params


# --------------------------------------------------------------------------------------
# Packing into kernel layout (lane-aligned, gate-padded, pre-transposed, bf16 weights).
# --------------------------------------------------------------------------------------
def _pack_gate_weight(w, in_p, Hp):
    """(4H, in) PyTorch gate weight -> (in_p, 4*Hp) transposed, per-gate zero-padded."""
    four_h, in_dim = w.shape
    H = four_h // 4
    w4 = w.reshape(4, H, in_dim)
    wp = jnp.zeros((4, Hp, in_p), dtype=w.dtype).at[:, :H, :in_dim].set(w4)
    return jnp.transpose(wp.reshape(4 * Hp, in_p))          # (in_p, 4*Hp)


def _pack_gate_bias(b, Hp):
    """(4H,) combined bias -> (1, 4*Hp) per-gate zero-padded."""
    H = b.shape[0] // 4
    bp = jnp.zeros((4, Hp), dtype=jnp.float32).at[:, :H].set(b.reshape(4, H))
    return bp.reshape(1, 4 * Hp)


def pack_decoder_params(params):
    V, E = params["embedding"].shape
    H = params["lstm"][0]["w_hh"].shape[1]
    L = len(params["lstm"])
    Ep, Hp = _round_up(E, LANE), _round_up(H, LANE)
    in_max_p = max(Ep, Hp)
    v_lane = _round_up(V, LANE)
    tile_v = min(v_lane, MAX_TILE_V)
    Vp = _round_up(V, tile_v)

    packed = {"dims": dict(V=V, E=E, H=H, L=L, Ep=Ep, Hp=Hp, Vp=Vp,
                           tile_v=tile_v, in_max_p=in_max_p)}

    # Embedding: lane-padded f32 rows gathered by in-kernel DMA (only B rows/step read).
    packed["embedding"] = jnp.zeros((V, Ep), jnp.float32).at[:, :E].set(
        params["embedding"])

    # Per-layer merged [w_ih ; w_hh], stacked over layers so one grid axis streams them.
    w_layers, b_layers = [], []
    for lp in params["lstm"]:
        wi = _pack_gate_weight(lp["w_ih"], in_max_p, Hp)     # (in_max_p, 4*Hp)
        wh = _pack_gate_weight(lp["w_hh"], Hp, Hp)           # (Hp,       4*Hp)
        w_layers.append(jnp.concatenate([wi, wh], axis=0).astype(jnp.bfloat16))
        b_layers.append(_pack_gate_bias(lp["b_ih"] + lp["b_hh"], Hp))
    packed["w_stack"] = jnp.stack(w_layers, axis=0)          # (L, in_max_p+Hp, 4*Hp) bf16
    packed["b_stack"] = jnp.stack(b_layers, axis=0)          # (L, 1, 4*Hp) f32

    fc_w_t = jnp.zeros((Hp, Vp), jnp.float32).at[:H, :V].set(params["fc_w"].T)
    packed["fc_w"] = fc_w_t.astype(jnp.bfloat16)             # (Hp, Vp) bf16
    packed["fc_b"] = jnp.zeros((1, Vp), jnp.float32).at[0, :V].set(params["fc_b"])
    return packed


# --------------------------------------------------------------------------------------
# Forward wrappers.
# --------------------------------------------------------------------------------------
def pad_decoder_state(state, Bp, Hp):
    """(L, B, H) -> padded (L, Bp, Hp). Call once before the decode loop."""
    L, B, H = state.shape
    return jnp.pad(state, ((0, 0), (0, Bp - B), (0, Hp - H)))


def decoder_step(packed, tokens, hidden_p, cell_p):
    """One decode step, state stays in the padded (L, Bp, Hp) layout.

    tokens:   (B,) int32
    hidden_p: (L, Bp, Hp) f32
    cell_p:   (L, Bp, Hp) f32
    returns   (prediction (B, V) f32, hidden_p, cell_p)
    """
    d = packed["dims"]
    V, L = d["V"], d["L"]
    Ep, Hp, Vp = d["Ep"], d["Hp"], d["Vp"]
    tile_v, in_max_p = d["tile_v"], d["in_max_p"]

    tokens = tokens.astype(jnp.int32)
    B = tokens.shape[0]
    Bp = _round_up(B, SUBLANE)
    assert hidden_p.shape == (L, Bp, Hp) and cell_p.shape == (L, Bp, Hp)

    num_v = Vp // tile_v
    in_rows = in_max_p + Hp
    grid = (L + num_v,)

    kernel = functools.partial(
        _decoder_step_kernel,
        num_layers=L, hidden_pad=Hp, embed_pad=Ep, in_max_pad=in_max_p,
        batch=B, batch_pad=Bp)

    # VMEM budget: double-buffered streamed blocks + resident state + scratch.
    blk_bytes = (2 * (in_rows * 4 * Hp * 2 + 4 * Hp * 4          # layer weights + bias
                      + Hp * tile_v * 2 + tile_v * 4             # fc_out weight + bias tile
                      + Bp * tile_v * 4)                         # pred tile
                 + 8 * L * Bp * Hp * 4                           # h/c in+out buffers
                 + Bp * in_rows * 2 + Bp * Ep * 4)               # scratch
    vmem_limit = int(min(max(2 * blk_bytes, 32 * 1024 * 1024), 64 * 1024 * 1024))

    idx_layer = lambda s, tok: (jnp.minimum(s, L - 1), 0, 0)     # clamp during fc phase
    idx_vocab = lambda s, tok: (0, jnp.maximum(s - L, 0))        # 0 during LSTM phase
    idx_const3 = lambda s, tok: (0, 0, 0)

    grid_spec = pltpu.PrefetchScalarGridSpec(
        num_scalar_prefetch=1,                                   # tokens -> SMEM
        grid=grid,
        in_specs=[
            pl.BlockSpec(memory_space=pl.ANY),                   # embedding table (HBM)
            pl.BlockSpec((L, Bp, Hp), idx_const3),               # h_in (resident)
            pl.BlockSpec((L, Bp, Hp), idx_const3),               # c_in (resident)
            pl.BlockSpec((1, in_rows, 4 * Hp), idx_layer),       # streamed layer weights
            pl.BlockSpec((1, 1, 4 * Hp), idx_layer),             # streamed layer bias
            pl.BlockSpec((Hp, tile_v), idx_vocab),               # streamed fc_out weights
            pl.BlockSpec((1, tile_v), idx_vocab),                # streamed fc_out bias
        ],
        out_specs=(
            pl.BlockSpec((Bp, tile_v), idx_vocab),               # prediction vocab tile
            pl.BlockSpec((L, Bp, Hp), idx_const3),               # h_out (resident)
            pl.BlockSpec((L, Bp, Hp), idx_const3),               # c_out (resident)
        ),
        scratch_shapes=[
            pltpu.VMEM((Bp, in_rows), jnp.bfloat16),             # merged [x ; h_prev] LHS
            pltpu.VMEM((Bp, Ep), jnp.float32),                   # embedding gather buffer
            pltpu.SemaphoreType.DMA((B,)),                       # gather semaphores
        ],
    )

    pred_p, h_out_p, c_out_p = pl.pallas_call(
        kernel,
        grid_spec=grid_spec,
        out_shape=(
            jax.ShapeDtypeStruct((Bp, Vp), jnp.float32),
            jax.ShapeDtypeStruct((L, Bp, Hp), jnp.float32),
            jax.ShapeDtypeStruct((L, Bp, Hp), jnp.float32),
        ),
        compiler_params=pltpu.CompilerParams(
            # Single fused axis carries LSTM state in scratch -> must be "arbitrary".
            dimension_semantics=("arbitrary",),
            vmem_limit_bytes=vmem_limit,
        ),
    )(tokens, packed["embedding"], hidden_p, cell_p,
      packed["w_stack"], packed["b_stack"], packed["fc_w"], packed["fc_b"])

    return pred_p[:B, :V], h_out_p, c_out_p


def decoder_forward(packed, tokens, hidden, cell):
    """Exact PyTorch Decoder.forward signature: (B,), (L,B,H), (L,B,H)."""
    d = packed["dims"]
    H, L, Hp = d["H"], d["L"], d["Hp"]
    B = tokens.shape[0]
    Bp = _round_up(B, SUBLANE)
    h_p = pad_decoder_state(hidden, Bp, Hp)
    c_p = pad_decoder_state(cell, Bp, Hp)
    pred, h_out_p, c_out_p = decoder_step(packed, tokens, h_p, c_p)
    return pred, h_out_p[:, :B, :H], c_out_p[:, :B, :H]


# --------------------------------------------------------------------------------------
# Pure-JAX f32 reference (exact PyTorch Decoder.forward, eval-mode dropout).
# --------------------------------------------------------------------------------------
def decoder_reference(params, tokens, hidden, cell):
    H = hidden.shape[-1]
    x = jnp.take(params["embedding"], tokens, axis=0)            # (B, E)
    h_out, c_out = [], []
    for l, lp in enumerate(params["lstm"]):
        gates = (x @ lp["w_ih"].T + hidden[l] @ lp["w_hh"].T
                 + lp["b_ih"] + lp["b_hh"])
        i_g = jax.nn.sigmoid(gates[:, 0 * H:1 * H])
        f_g = jax.nn.sigmoid(gates[:, 1 * H:2 * H])
        g_g = jnp.tanh(gates[:, 2 * H:3 * H])
        o_g = jax.nn.sigmoid(gates[:, 3 * H:4 * H])
        c_new = f_g * cell[l] + i_g * g_g
        h_new = o_g * jnp.tanh(c_new)
        h_out.append(h_new)
        c_out.append(c_new)
        x = h_new
    pred = x @ params["fc_w"].T + params["fc_b"]
    return pred, jnp.stack(h_out, axis=0), jnp.stack(c_out, axis=0)


if __name__ == "__main__":
    output_dim, embed_dim, hidden_dim, num_layers = 50, 16, 32, 2
    batch = 2

    key = jax.random.PRNGKey(0)
    k_params, k_tok1, k_tok2, k_h, k_c = jax.random.split(key, 5)
    params = init_decoder_params(k_params, output_dim, embed_dim, hidden_dim, num_layers)
    packed = pack_decoder_params(params)
    d = packed["dims"]
    Hp = d["Hp"]
    Bp = _round_up(batch, SUBLANE)

    tokens1 = jax.random.randint(k_tok1, (batch,), 0, output_dim, dtype=jnp.int32)
    tokens2 = jax.random.randint(k_tok2, (batch,), 0, output_dim, dtype=jnp.int32)
    hidden = jax.random.normal(k_h, (num_layers, batch, hidden_dim), dtype=jnp.float32)
    cell = jax.random.normal(k_c, (num_layers, batch, hidden_dim), dtype=jnp.float32)

    # --- PyTorch-signature path (pads/unpads around a single step) -------------------
    fwd = jax.jit(functools.partial(decoder_forward, packed))
    pred, hidden_new, cell_new = fwd(tokens1, hidden, cell)
    jax.block_until_ready((pred, hidden_new, cell_new))
    assert pred.shape == (batch, output_dim)
    assert hidden_new.shape == (num_layers, batch, hidden_dim)
    assert cell_new.shape == (num_layers, batch, hidden_dim)

    ref1_pred, ref1_h, ref1_c = decoder_reference(params, tokens1, hidden, cell)
    np.testing.assert_allclose(np.asarray(pred), np.asarray(ref1_pred),
                               rtol=2e-2, atol=2e-2)
    np.testing.assert_allclose(np.asarray(hidden_new), np.asarray(ref1_h),
                               rtol=2e-2, atol=2e-2)
    np.testing.assert_allclose(np.asarray(cell_new), np.asarray(ref1_c),
                               rtol=2e-2, atol=2e-2)

    # --- Padded-state decode-loop path (no per-step pad/slice of the state) ----------
    step = jax.jit(functools.partial(decoder_step, packed))
    h_p = pad_decoder_state(hidden, Bp, Hp)
    c_p = pad_decoder_state(cell, Bp, Hp)
    pred1, h_p, c_p = step(tokens1, h_p, c_p)
    pred2, h_p, c_p = step(tokens2, h_p, c_p)
    jax.block_until_ready((pred2, h_p, c_p))

    ref2_pred, ref2_h, ref2_c = decoder_reference(params, tokens2, ref1_h, ref1_c)
    np.testing.assert_allclose(np.asarray(pred1), np.asarray(ref1_pred),
                               rtol=2e-2, atol=2e-2)
    np.testing.assert_allclose(np.asarray(pred2), np.asarray(ref2_pred),
                               rtol=5e-2, atol=5e-2)
    np.testing.assert_allclose(np.asarray(h_p[:, :batch, :hidden_dim]),
                               np.asarray(ref2_h), rtol=5e-2, atol=5e-2)
    np.testing.assert_allclose(np.asarray(c_p[:, :batch, :hidden_dim]),
                               np.asarray(ref2_c), rtol=5e-2, atol=5e-2)

    print("KERNEL_OK")
</pallas_src>

<mosaic_0001>
module attributes {stable_mosaic.version = 11 : i64} {
  func.func @_decoder_step_kernel(%arg0: i32, %arg1: memref<2xi32, #tpu.memory_space<smem>>, %arg2: memref<50x128xf32, #tpu.memory_space<any>>, %arg3: memref<2x8x128xf32, #tpu.memory_space<vmem>>, %arg4: memref<2x8x128xf32, #tpu.memory_space<vmem>>, %arg5: memref<1x256x512xbf16, #tpu.memory_space<vmem>>, %arg6: memref<1x1x512xf32, #tpu.memory_space<vmem>>, %arg7: memref<128x128xbf16, #tpu.memory_space<vmem>>, %arg8: memref<1x128xf32, #tpu.memory_space<vmem>>, %arg9: memref<8x128xf32, #tpu.memory_space<vmem>>, %arg10: memref<2x8x128xf32, #tpu.memory_space<vmem>>, %arg11: memref<2x8x128xf32, #tpu.memory_space<vmem>>, %arg12: memref<8x256xbf16, #tpu.memory_space<vmem>>, %arg13: memref<8x128xf32, #tpu.memory_space<vmem>>, %arg14: memref<2x!tpu.dma_semaphore, #tpu.memory_space<semaphore_mem>>) attributes {dimension_semantics = [#tpu.dimension_semantics<arbitrary>], iteration_bounds = array<i64: 3>, scalar_prefetch = 1 : i64, scratch_operands = 3 : i64, tpu.core_type = #tpu.core_type<tc>, window_params = [{}, {pipeline_mode = #tpu.pipeline_mode<synchronous>, transform_indices = @transform_1, window_bounds = array<i64: 2, 8, 128>}, {pipeline_mode = #tpu.pipeline_mode<synchronous>, transform_indices = @transform_2, window_bounds = array<i64: 2, 8, 128>}, {transform_indices = @transform_3, window_bounds = array<i64: 1, 256, 512>}, {transform_indices = @transform_4, window_bounds = array<i64: 1, 1, 512>}, {transform_indices = @transform_5, window_bounds = array<i64: 128, 128>}, {transform_indices = @transform_6, window_bounds = array<i64: 1, 128>}, {transform_indices = @transform_7, window_bounds = array<i64: 8, 128>}, {pipeline_mode = #tpu.pipeline_mode<synchronous>, transform_indices = @transform_8, window_bounds = array<i64: 2, 8, 128>}, {pipeline_mode = #tpu.pipeline_mode<synchronous>, transform_indices = @transform_9, window_bounds = array<i64: 2, 8, 128>}]} {
    %c0_i32 = arith.constant 0 : i32
    %0 = arith.cmpi eq, %arg0, %c0_i32 : i32
    %1 = arith.extui %0 : i1 to i32
    %c0_i32_0 = arith.constant 0 : i32
    %2 = arith.cmpi ne, %1, %c0_i32_0 : i32
    scf.if %2 {
      %cst = arith.constant 0.000000e+00 : bf16
      %9 = vector.broadcast %cst : bf16 to vector<8x256xbf16>
      %c0 = arith.constant 0 : index
      %c0_4 = arith.constant 0 : index
      %10 = vector.load %arg12[%c0, %c0_4] : memref<8x256xbf16, #tpu.memory_space<vmem>>, vector<8x256xbf16>
      tpu.vector_store %arg12[%c0, %c0_4], %9 {strides = array<i32>} : memref<8x256xbf16, #tpu.memory_space<vmem>>, vector<8x256xbf16>,
      %c0_5 = arith.constant 0 : index
      %11 = memref.load %arg1[%c0_5] : memref<2xi32, #tpu.memory_space<smem>>
      %c1 = arith.constant 1 : index
      %12 = memref.load %arg1[%c1] : memref<2xi32, #tpu.memory_space<smem>>
      %c0_i32_6 = arith.constant 0 : i32
      %c0_i32_7 = arith.constant 0 : i32
      %13 = tpu.memref_slice %arg2[%11, %c0_i32_7] : memref<50x128xf32, #tpu.memory_space<any>> -> memref<1x128xf32, #tpu.memory_space<any>>
      %c0_i32_8 = arith.constant 0 : i32
      %c0_i32_9 = arith.constant 0 : i32
      %14 = tpu.memref_slice %arg13[%c0_i32_8, %c0_i32_9] : memref<8x128xf32, #tpu.memory_space<vmem>> -> memref<1x128xf32, #tpu.memory_space<vmem>>
      %15 = tpu.memref_slice %arg14[%c0_i32_6] : memref<2x!tpu.dma_semaphore, #tpu.memory_space<semaphore_mem>> -> memref<1x!tpu.dma_semaphore, #tpu.memory_space<semaphore_mem>>
      %16 = tpu.memref_squeeze %15 : memref<1x!tpu.dma_semaphore, #tpu.memory_space<semaphore_mem>> -> memref<!tpu.dma_semaphore, #tpu.memory_space<semaphore_mem>>
      tpu.enqueue_dma source(%13 : memref<1x128xf32, #tpu.memory_space<any>>) target(%14 : memref<1x128xf32, #tpu.memory_space<vmem>>) target_semaphore(%16 : memref<!tpu.dma_semaphore, #tpu.memory_space<semaphore_mem>>)
      %c1_i32 = arith.constant 1 : i32
      %c0_i32_10 = arith.constant 0 : i32
      %17 = tpu.memref_slice %arg2[%12, %c0_i32_10] : memref<50x128xf32, #tpu.memory_space<any>> -> memref<1x128xf32, #tpu.memory_space<any>>
      %c1_i32_11 = arith.constant 1 : i32
      %c0_i32_12 = arith.constant 0 : i32
      %18 = tpu.memref_slice %arg13[%c1_i32_11, %c0_i32_12] : memref<8x128xf32, #tpu.memory_space<vmem>> -> memref<1x128xf32, #tpu.memory_space<vmem>>
      %19 = tpu.memref_slice %arg14[%c1_i32] : memref<2x!tpu.dma_semaphore, #tpu.memory_space<semaphore_mem>> -> memref<1x!tpu.dma_semaphore, #tpu.memory_space<semaphore_mem>>
      %20 = tpu.memref_squeeze %19 : memref<1x!tpu.dma_semaphore, #tpu.memory_space<semaphore_mem>> -> memref<!tpu.dma_semaphore, #tpu.memory_space<semaphore_mem>>
      tpu.enqueue_dma source(%17 : memref<1x128xf32, #tpu.memory_space<any>>) target(%18 : memref<1x128xf32, #tpu.memory_space<vmem>>) target_semaphore(%20 : memref<!tpu.dma_semaphore, #tpu.memory_space<semaphore_mem>>)
      %c0_i32_13 = arith.constant 0 : i32
      %c0_i32_14 = arith.constant 0 : i32
      %21 = tpu.memref_slice %arg2[%11, %c0_i32_14] : memref<50x128xf32, #tpu.memory_space<any>> -> memref<1x128xf32, #tpu.memory_space<any>>
      %c0_i32_15 = arith.constant 0 : i32
      %c0_i32_16 = arith.constant 0 : i32
      %22 = tpu.memref_slice %arg13[%c0_i32_15, %c0_i32_16] : memref<8x128xf32, #tpu.memory_space<vmem>> -> memref<1x128xf32, #tpu.memory_space<vmem>>
      %23 = tpu.memref_slice %arg14[%c0_i32_13] : memref<2x!tpu.dma_semaphore, #tpu.memory_space<semaphore_mem>> -> memref<1x!tpu.dma_semaphore, #tpu.memory_space<semaphore_mem>>
      %24 = tpu.memref_squeeze %23 : memref<1x!tpu.dma_semaphore, #tpu.memory_space<semaphore_mem>> -> memref<!tpu.dma_semaphore, #tpu.memory_space<semaphore_mem>>
      tpu.wait_dma2 semaphore(%24 : memref<!tpu.dma_semaphore, #tpu.memory_space<semaphore_mem>>) src(%21 : memref<1x128xf32, #tpu.memory_space<any>>) dst(%22 : memref<1x128xf32, #tpu.memory_space<vmem>>)
      %c1_i32_17 = arith.constant 1 : i32
      %c0_i32_18 = arith.constant 0 : i32
      %25 = tpu.memref_slice %arg2[%12, %c0_i32_18] : memref<50x128xf32, #tpu.memory_space<any>> -> memref<1x128xf32, #tpu.memory_space<any>>
      %c1_i32_19 = arith.constant 1 : i32
      %c0_i32_20 = arith.constant 0 : i32
      %26 = tpu.memref_slice %arg13[%c1_i32_19, %c0_i32_20] : memref<8x128xf32, #tpu.memory_space<vmem>> -> memref<1x128xf32, #tpu.memory_space<vmem>>
      %27 = tpu.memref_slice %arg14[%c1_i32_17] : memref<2x!tpu.dma_semaphore, #tpu.memory_space<semaphore_mem>> -> memref<1x!tpu.dma_semaphore, #tpu.memory_space<semaphore_mem>>
      %28 = tpu.memref_squeeze %27 : memref<1x!tpu.dma_semaphore, #tpu.memory_space<semaphore_mem>> -> memref<!tpu.dma_semaphore, #tpu.memory_space<semaphore_mem>>
      tpu.wait_dma2 semaphore(%28 : memref<!tpu.dma_semaphore, #tpu.memory_space<semaphore_mem>>) src(%25 : memref<1x128xf32, #tpu.memory_space<any>>) dst(%26 : memref<1x128xf32, #tpu.memory_space<vmem>>)
      %c0_21 = arith.constant 0 : index
      %c0_22 = arith.constant 0 : index
      %29 = vector.load %arg13[%c0_21, %c0_22] : memref<8x128xf32, #tpu.memory_space<vmem>>, vector<8x128xf32>
      %30 = tpu.iota {dimensions = array<i32: 0>} : vector<8x128xi32>
      %c2_i32_23 = arith.constant 2 : i32
      %31 = vector.broadcast %c2_i32_23 : i32 to vector<8x128xi32>
      %32 = arith.cmpi slt, %30, %31 : vector<8x128xi32>
      %cst_24 = arith.constant 0.000000e+00 : f32
      %33 = vector.broadcast %cst_24 : f32 to vector<8x128xf32>
      %34 = arith.select %32, %29, %33 : vector<8x128xi1>, vector<8x128xf32>
      %35 = arith.truncf %34 : vector<8x128xf32> to vector<8x128xbf16>
      %c0_25 = arith.constant 0 : index
      %c0_26 = arith.constant 0 : index
      %36 = vector.load %arg12[%c0_25, %c0_26] : memref<8x256xbf16, #tpu.memory_space<vmem>>, vector<8x128xbf16>
      tpu.vector_store %arg12[%c0_25, %c0_26], %35 {strides = array<i32>} : memref<8x256xbf16, #tpu.memory_space<vmem>>, vector<8x128xbf16>,
    } else {
    }
    %c2_i32 = arith.constant 2 : i32
    %3 = arith.cmpi slt, %arg0, %c2_i32 : i32
    %4 = arith.extui %3 : i1 to i32
    %c0_i32_1 = arith.constant 0 : i32
    %5 = arith.cmpi ne, %4, %c0_i32_1 : i32
    scf.if %5 {
      %9 = arith.index_cast %arg0 : i32 to index
      %c0 = arith.constant 0 : index
      %c0_4 = arith.constant 0 : index
      %10 = vector.load %arg3[%9, %c0, %c0_4] : memref<2x8x128xf32, #tpu.memory_space<vmem>>, vector<1x8x128xf32>
      %11 = vector.shape_cast %10 : vector<1x8x128xf32> to vector<8x128xf32>
      %12 = arith.truncf %11 : vector<8x128xf32> to vector<8x128xbf16>
      %c0_5 = arith.constant 0 : index
      %c128 = arith.constant 128 : index
      %13 = vector.load %arg12[%c0_5, %c128] : memref<8x256xbf16, #tpu.memory_space<vmem>>, vector<8x128xbf16>
      tpu.vector_store %arg12[%c0_5, %c128], %12 {strides = array<i32>} : memref<8x256xbf16, #tpu.memory_space<vmem>>, vector<8x128xbf16>,
      %c0_6 = arith.constant 0 : index
      %c0_7 = arith.constant 0 : index
      %14 = vector.load %arg12[%c0_6, %c0_7] : memref<8x256xbf16, #tpu.memory_space<vmem>>, vector<8x256xbf16>
      %c0_8 = arith.constant 0 : index
      %c0_9 = arith.constant 0 : index
      %c0_10 = arith.constant 0 : index
      %15 = vector.load %arg5[%c0_8, %c0_9, %c0_10] : memref<1x256x512xbf16, #tpu.memory_space<vmem>>, vector<1x256x512xbf16>
      %16 = vector.shape_cast %15 : vector<1x256x512xbf16> to vector<256x512xbf16>
      %cst = arith.constant dense<0.000000e+00> : vector<8x512xf32>
      %17 = tpu.matmul %14, %16, %cst {dimension_numbers = #tpu.dot_dimension_numbers<[1], [0], [0], [1], [0, 0, 1, 1], [], []>} : vector<8x256xbf16>, vector<256x512xbf16>, vector<8x512xf32> -> vector<8x512xf32>
      %c0_11 = arith.constant 0 : index
      %c0_12 = arith.constant 0 : index
      %c0_13 = arith.constant 0 : index
      %18 = vector.load %arg6[%c0_11, %c0_12, %c0_13] : memref<1x1x512xf32, #tpu.memory_space<vmem>>, vector<1x1x512xf32>
      %19 = vector.shape_cast %18 : vector<1x1x512xf32> to vector<1x512xf32>
      %20 = vector.broadcast %19 : vector<1x512xf32> to vector<8x512xf32>
      %21 = arith.addf %17, %20 : vector<8x512xf32>
      %22 = vector.extract_strided_slice %21 {offsets = [0, 0], sizes = [8, 128], strides = [1, 1]} : vector<8x512xf32> to vector<8x128xf32>
      %23 = arith.negf %22 : vector<8x128xf32>
      %24 = math.exp %23 : vector<8x128xf32>
      %cst_14 = arith.constant 1.000000e+00 : f32
      %25 = vector.broadcast %cst_14 : f32 to vector<8x128xf32>
      %26 = arith.addf %25, %24 : vector<8x128xf32>
      %27 = arith.divf %25, %26 : vector<8x128xf32>
      %28 = vector.extract_strided_slice %21 {offsets = [0, 128], sizes = [8, 128], strides = [1, 1]} : vector<8x512xf32> to vector<8x128xf32>
      %29 = arith.negf %28 : vector<8x128xf32>
      %30 = math.exp %29 : vector<8x128xf32>
      %cst_15 = arith.constant 1.000000e+00 : f32
      %31 = vector.broadcast %cst_15 : f32 to vector<8x128xf32>
      %32 = arith.addf %31, %30 : vector<8x128xf32>
      %33 = arith.divf %31, %32 : vector<8x128xf32>
      %34 = vector.extract_strided_slice %21 {offsets = [0, 256], sizes = [8, 128], strides = [1, 1]} : vector<8x512xf32> to vector<8x128xf32>
      %35 = math.tanh %34 : vector<8x128xf32>
      %36 = vector.extract_strided_slice %21 {offsets = [0, 384], sizes = [8, 128], strides = [1, 1]} : vector<8x512xf32> to vector<8x128xf32>
      %37 = arith.negf %36 : vector<8x128xf32>
      %38 = math.exp %37 : vector<8x128xf32>
      %cst_16 = arith.constant 1.000000e+00 : f32
      %39 = vector.broadcast %cst_16 : f32 to vector<8x128xf32>
      %40 = arith.addf %39, %38 : vector<8x128xf32>
      %41 = arith.divf %39, %40 : vector<8x128xf32>
      %42 = arith.index_cast %arg0 : i32 to index
      %c0_17 = arith.constant 0 : index
      %c0_18 = arith.constant 0 : index
      %43 = vector.load %arg4[%42, %c0_17, %c0_18] : memref<2x8x128xf32, #tpu.memory_space<vmem>>, vector<1x8x128xf32>
      %44 = vector.shape_cast %43 : vector<1x8x128xf32> to vector<8x128xf32>
      %45 = arith.mulf %33, %44 : vector<8x128xf32>
      %46 = arith.mulf %27, %35 : vector<8x128xf32>
      %47 = arith.addf %45, %46 : vector<8x128xf32>
      %48 = math.tanh %47 : vector<8x128xf32>
      %49 = arith.mulf %41, %48 : vector<8x128xf32>
      %50 = arith.index_cast %arg0 : i32 to index
      %c0_19 = arith.constant 0 : index
      %c0_20 = arith.constant 0 : index
      %51 = vector.load %arg10[%50, %c0_19, %c0_20] : memref<2x8x128xf32, #tpu.memory_space<vmem>>, vector<1x8x128xf32>
      %52 = vector.shape_cast %51 : vector<1x8x128xf32> to vector<8x128xf32>
      %53 = vector.shape_cast %49 : vector<8x128xf32> to vector<1x8x128xf32>
      tpu.vector_store %arg10[%50, %c0_19, %c0_20], %53 {strides = array<i32>} : memref<2x8x128xf32, #tpu.memory_space<vmem>>, vector<1x8x128xf32>,
      %54 = arith.index_cast %arg0 : i32 to index
      %c0_21 = arith.constant 0 : index
      %c0_22 = arith.constant 0 : index
      %55 = vector.load %arg11[%54, %c0_21, %c0_22] : memref<2x8x128xf32, #tpu.memory_space<vmem>>, vector<1x8x128xf32>
      %56 = vector.shape_cast %55 : vector<1x8x128xf32> to vector<8x128xf32>
      %57 = vector.shape_cast %47 : vector<8x128xf32> to vector<1x8x128xf32>
      tpu.vector_store %arg11[%54, %c0_21, %c0_22], %57 {strides = array<i32>} : memref<2x8x128xf32, #tpu.memory_space<vmem>>, vector<1x8x128xf32>,
      %58 = arith.truncf %49 : vector<8x128xf32> to vector<8x128xbf16>
      %c0_23 = arith.constant 0 : index
      %c0_24 = arith.constant 0 : index
      %59 = vector.load %arg12[%c0_23, %c0_24] : memref<8x256xbf16, #tpu.memory_space<vmem>>, vector<8x128xbf16>
      tpu.vector_store %arg12[%c0_23, %c0_24], %58 {strides = array<i32>} : memref<8x256xbf16, #tpu.memory_space<vmem>>, vector<8x128xbf16>,
    } else {
    }
    %c2_i32_2 = arith.constant 2 : i32
    %6 = arith.cmpi sge, %arg0, %c2_i32_2 : i32
    %7 = arith.extui %6 : i1 to i32
    %c0_i32_3 = arith.constant 0 : i32
    %8 = arith.cmpi ne, %7, %c0_i32_3 : i32
    scf.if %8 {
      %c0 = arith.constant 0 : index
      %c0_4 = arith.constant 0 : index
      %9 = vector.load %arg12[%c0, %c0_4] : memref<8x256xbf16, #tpu.memory_space<vmem>>, vector<8x128xbf16>
      %c0_5 = arith.constant 0 : index
      %c0_6 = arith.constant 0 : index
      %10 = vector.load %arg7[%c0_5, %c0_6] : memref<128x128xbf16, #tpu.memory_space<vmem>>, vector<128x128xbf16>
      %cst = arith.constant dense<0.000000e+00> : vector<8x128xf32>
      %11 = tpu.matmul %9, %10, %cst {dimension_numbers = #tpu.dot_dimension_numbers<[1], [0], [0], [1], [0, 0, 1, 1], [], []>} : vector<8x128xbf16>, vector<128x128xbf16>, vector<8x128xf32> -> vector<8x128xf32>
      %c0_7 = arith.constant 0 : index
      %c0_8 = arith.constant 0 : index
      %12 = vector.load %arg8[%c0_7, %c0_8] : memref<1x128xf32, #tpu.memory_space<vmem>>, vector<1x128xf32>
      %13 = vector.broadcast %12 : vector<1x128xf32> to vector<8x128xf32>
      %14 = arith.addf %11, %13 : vector<8x128xf32>
      %c0_9 = arith.constant 0 : index
      %c0_10 = arith.constant 0 : index
      %15 = vector.load %arg9[%c0_9, %c0_10] : memref<8x128xf32, #tpu.memory_space<vmem>>, vector<8x128xf32>
      tpu.vector_store %arg9[%c0_9, %c0_10], %14 {strides = array<i32>} : memref<8x128xf32, #tpu.memory_space<vmem>>, vector<8x128xf32>,
    } else {
    }
    return
  }
  func.func @transform_1(%arg0: i32, %arg1: memref<2xi32, #tpu.memory_space<smem>>) -> (i32, i32, i32) {
    %c0_i32 = arith.constant 0 : i32
    %c0_i32_0 = arith.constant 0 : i32
    %c0_i32_1 = arith.constant 0 : i32
    %c0_i32_2 = arith.constant 0 : i32
    return %c0_i32, %c0_i32_0, %c0_i32_1 : i32, i32, i32
  }
  func.func @transform_2(%arg0: i32, %arg1: memref<2xi32, #tpu.memory_space<smem>>) -> (i32, i32, i32) {
    %c0_i32 = arith.constant 0 : i32
    %c0_i32_0 = arith.constant 0 : i32
    %c0_i32_1 = arith.constant 0 : i32
    %c0_i32_2 = arith.constant 0 : i32
    return %c0_i32, %c0_i32_0, %c0_i32_1 : i32, i32, i32
  }
  func.func @transform_3(%arg0: i32, %arg1: memref<2xi32, #tpu.memory_space<smem>>) -> (i32, i32, i32) {
    %c1_i32 = arith.constant 1 : i32
    %0 = arith.minsi %arg0, %c1_i32 : i32
    %c0_i32 = arith.constant 0 : i32
    %c0_i32_0 = arith.constant 0 : i32
    %c0_i32_1 = arith.constant 0 : i32
    return %0, %c0_i32, %c0_i32_0 : i32, i32, i32
  }
  func.func @transform_4(%arg0: i32, %arg1: memref<2xi32, #tpu.memory_space<smem>>) -> (i32, i32, i32) {
    %c1_i32 = arith.constant 1 : i32
    %0 = arith.minsi %arg0, %c1_i32 : i32
    %c0_i32 = arith.constant 0 : i32
    %c0_i32_0 = arith.constant 0 : i32
    %c0_i32_1 = arith.constant 0 : i32
    return %0, %c0_i32, %c0_i32_0 : i32, i32, i32
  }
  func.func @transform_5(%arg0: i32, %arg1: memref<2xi32, #tpu.memory_space<smem>>) -> (i32, i32) {
    %c2_i32 = arith.constant 2 : i32
    %0 = arith.subi %arg0, %c2_i32 : i32
    %c0_i32 = arith.constant 0 : i32
    %1 = arith.maxsi %0, %c0_i32 : i32
    %c0_i32_0 = arith.constant 0 : i32
    %c0_i32_1 = arith.constant 0 : i32
    return %c0_i32_0, %1 : i32, i32
  }
  func.func @transform_6(%arg0: i32, %arg1: memref<2xi32, #tpu.memory_space<smem>>) -> (i32, i32) {
    %c2_i32 = arith.constant 2 : i32
    %0 = arith.subi %arg0, %c2_i32 : i32
    %c0_i32 = arith.constant 0 : i32
    %1 = arith.maxsi %0, %c0_i32 : i32
    %c0_i32_0 = arith.constant 0 : i32
    %c0_i32_1 = arith.constant 0 : i32
    return %c0_i32_0, %1 : i32, i32
  }
  func.func @transform_7(%arg0: i32, %arg1: memref<2xi32, #tpu.memory_space<smem>>) -> (i32, i32) {
    %c2_i32 = arith.constant 2 : i32
    %0 = arith.subi %arg0, %c2_i32 : i32
    %c0_i32 = arith.constant 0 : i32
    %1 = arith.maxsi %0, %c0_i32 : i32
    %c0_i32_0 = arith.constant 0 : i32
    %c0_i32_1 = arith.constant 0 : i32
    return %c0_i32_0, %1 : i32, i32
  }
  func.func @transform_8(%arg0: i32, %arg1: memref<2xi32, #tpu.memory_space<smem>>) -> (i32, i32, i32) {
    %c0_i32 = arith.constant 0 : i32
    %c0_i32_0 = arith.constant 0 : i32
    %c0_i32_1 = arith.constant 0 : i32
    %c0_i32_2 = arith.constant 0 : i32
    return %c0_i32, %c0_i32_0, %c0_i32_1 : i32, i32, i32
  }
  func.func @transform_9(%arg0: i32, %arg1: memref<2xi32, #tpu.memory_space<smem>>) -> (i32, i32, i32) {
    %c0_i32 = arith.constant 0 : i32
    %c0_i32_0 = arith.constant 0 : i32
    %c0_i32_1 = arith.constant 0 : i32
    %c0_i32_2 = arith.constant 0 : i32
    return %c0_i32, %c0_i32_0, %c0_i32_1 : i32, i32, i32
  }
}

</mosaic_0001>

<llo_original>
// kernel: decoder_forward.1
$region0: #{decoder_forward.1}
  #allocation0 [shape = 'u32[]', space=smem, size = 0x4, offset = 0x4, fixed_abs, tag = 'smem constant byte address 0x4 - core index']
  #allocation1 [shape = 'u32[144,128]{1,0:T(1,128)}', space=vmem, size = 0x12000, scoped, tag = 'internal scratch']
  #allocation2 [shape = 'bf16[8,256]{1,0:T(8,128)(2,1)}', space=vmem, size = 0x1000, scoped, tag = 'scratch operand']
  #allocation3 [shape = 'f32[8,128]{1,0:T(8,128)}', space=vmem, size = 0x1000, scoped, tag = 'scratch operand']
  #allocation4 [shape = 's32[2]{0}', space=sflag, size = 0x8, scoped, tag = 'scratch operand']
  #allocation5 [shape = 's32[1]{0}', space=sflag, size = 0x4, scoped, tag = 'scoped memory for decoder_forward.1']
  #allocation6 [shape = 'u8[512]{0}', space=smem, size = 0x200, scoped, tag = 'prefetched SMEM operand 0']
  #allocation11 [shape = 's32[]', space=sflag, size = 0x4, offset = 0, fixed_abs, tag = 'sflag constant byte address 0x0 - dummy sync flag']
  #allocation12 [shape = 's32[]', space=sflag, size = 0x4, offset = 0, fixed_abs, tag = 'sflag constant byte address 0x0 - dummy sync flag']
  #allocation13 [shape = 'u32[]', space=smem, size = 0x4, offset = 0x44, fixed_abs, tag = 'smem constant byte address 0x44 - assertion arg 0']
  #allocation14 [shape = 'u32[]', space=smem, size = 0x4, offset = 0x48, fixed_abs, tag = 'smem constant byte address 0x48 - assertion arg 1']
  #allocation15 [shape = 's32[]', space=sflag, size = 0x4, offset = 0, fixed_abs, tag = 'sflag constant byte address 0x0 - dummy sync flag']
  #allocation16 [shape = 's32[]', space=sflag, size = 0x4, offset = 0, fixed_abs, tag = 'sflag constant byte address 0x0 - dummy sync flag']
  %s0 = inlined_call_operand.vmem [shape: s32[2], index: 0, kind: input, shape index: {}]
  %s1 = inlined_call_operand.hbm [shape: f32[50,128], index: 1, kind: input, shape index: {}]
  %s2 = inlined_call_operand.vmem [shape: f32[2,8,128], index: 2, kind: input, shape index: {}]
  %s3 = inlined_call_operand.vmem [shape: f32[2,8,128], index: 3, kind: input, shape index: {}]
  %s4 = inlined_call_operand.hbm [shape: bf16[2,256,512], index: 4, kind: input, shape index: {}]
  %s5 = inlined_call_operand.vmem [shape: f32[2,1,512], index: 5, kind: input, shape index: {}]
  %s6 = inlined_call_operand.hbm [shape: bf16[128,128], index: 6, kind: input, shape index: {}]
  %s7 = inlined_call_operand.vmem [shape: f32[1,128], index: 7, kind: input, shape index: {}]
  %s8 = inlined_call_operand.vmem [shape: f32[8,128], index: 8, kind: output, shape index: {0}]
  %s9 = inlined_call_operand.vmem [shape: f32[2,8,128], index: 9, kind: output, shape index: {1}]
  %s10 = inlined_call_operand.vmem [shape: f32[2,8,128], index: 10, kind: output, shape index: {2}]
  %11 = xla_tuple %s8, %s9, %s10
  %s12 = sld [smem:[#allocation0]]
  $region101: #{decoder_forward.1} parent=0
    _
  %s14 = ssub.s32 1, %s12
  %s15 = scalar_select 0, %s14, %s12
  %s16 = sshll.u32 %s0, 4
  %s17 = int_to_ptr.vmem [resolvable:$true] %s16
  %19 = dma.vmem_to_smem %s17, 16, [#allocation6], [#allocation5]
  %20 = dma.done [#allocation5], 16
  %21 = sfence
  $region1: #{decoder_forward.1} parent=0
    #allocation7 [shape = 'u8[524288]{0}', space=vmem, size = 0x80000, scoped, tag = 'input window, operand 4']
    #allocation8 [shape = 's32[2]{0}', space=sflag, size = 0x8, scoped, tag = 'scoped memory for decoder_forward.1']
    #allocation9 [shape = 'u8[65536]{0}', space=vmem, size = 0x10000, scoped, tag = 'input window, operand 6']
    #allocation10 [shape = 's32[2]{0}', space=sflag, size = 0x8, scoped, tag = 'scoped memory for decoder_forward.1']
    %22 = vsyncpa [#allocation8], 0
    %s23 = scalar_lea.sflag [#allocation8], 1
    %24 = vsyncpa %s23, 0
    %25 = vsyncpa [#allocation10], 0
    %s26 = scalar_lea.sflag [#allocation10], 1
    %27 = vsyncpa %s26, 0
    loop: start=0, step=1, limit=5
    $region2: #{decoder_forward.1} parent=1 // loop_pre_header
      _
    $region3: #{decoder_forward.1} parent=1 // loop_header
      %s29 = sphi 0, %s33
      %p30 = scmp.ge.s32.totalorder %s29, 5
      %s37 = sphi 0, %s37
      %s39 = sphi 0, %s37
      %s40 = sphi 0, %s39
      %s54 = sphi 0, %s40
      %s58 = sphi 0, %s58
      %s60 = sphi 0, %s58
      %s61 = sphi 0, %s60
      %s75 = sphi 0, %s61
      %s85 = sphi 0, %s87
      %s88 = sphi 0, %s85
      %s89 = sphi 0, %s88
      %s105 = sphi 0, %s89
      %s115 = sphi 0, %s117
      %s118 = sphi 0, %s115
      %s119 = sphi 0, %s118
      %s135 = sphi 0, %s119
      %s147 = sphi 0, %s149
      %s150 = sphi 0, %s147
      %s151 = sphi 0, %s150
      %s167 = sphi 0, %s151
      %s179 = sphi 0, %s181
      %s182 = sphi 0, %s179
      %s183 = sphi 0, %s182
      %s199 = sphi 0, %s183
      %s211 = sphi 0, %s213
      %s214 = sphi 0, %s211
      %s215 = sphi 0, %s214
      %s231 = sphi 0, %s215
      %s235 = sphi 0, %s235
      %s237 = sphi 0, %s235
      %s238 = sphi 0, %s237
      %s252 = sphi 0, %s238
      %s256 = sphi 0, %s256
      %s258 = sphi 0, %s256
      %s259 = sphi 0, %s258
      %s273 = sphi 0, %s259
    $region4: #{decoder_forward.1} parent=1 // loop_header_branch
      %32 = sbr.rel (%p30) target = $region8
    $region5: #{decoder_forward.1} parent=1 // loop_body
      %s34 = ssub.s32 %s29, 1
      %s35 = ssub.s32 %s29, 2
      %s36 = sadd.s32 %s29, 1
      %s38 = sadd.s32 %s37, 1
      %p41 = scmp.eq.s32.totalorder %s29, 2
      %p42 = scmp.ne.s32.totalorder %s37, %s39
      %p43 = scmp.eq.s32.totalorder %s29, 0
      %p44 = por %p42, %p43
      %p45 = scmp.ne.s32.totalorder %s37, %s39
      %p46 = scmp.eq.s32.totalorder %s34, 2
      %p47 = por %p45, %p46
      %p48 = scmp.ne.s32.totalorder %s39, %s40
      %p49 = scmp.eq.s32.totalorder %s34, 0
      %p50 = por %p48, %p49
      %p51 = scmp.ne.s32.totalorder %s39, %s40
      %p52 = scmp.eq.s32.totalorder %s35, 2
      %p53 = por %p51, %p52
      %p55 = scmp.ne.s32.totalorder %s40, %s54
      %p56 = scmp.eq.s32.totalorder %s35, 0
      %p57 = por %p55, %p56
      %s59 = sadd.s32 %s58, 1
      %p62 = scmp.eq.s32.totalorder %s29, 2
      %p63 = scmp.ne.s32.totalorder %s58, %s60
      %p64 = scmp.eq.s32.totalorder %s29, 0
      %p65 = por %p63, %p64
      %p66 = scmp.ne.s32.totalorder %s58, %s60
      %p67 = scmp.eq.s32.totalorder %s34, 2
      %p68 = por %p66, %p67
      %p69 = scmp.ne.s32.totalorder %s60, %s61
      %p70 = scmp.eq.s32.totalorder %s34, 0
      %p71 = por %p69, %p70
      %p72 = scmp.ne.s32.totalorder %s60, %s61
      %p73 = scmp.eq.s32.totalorder %s35, 2
      %p74 = por %p72, %p73
      %p76 = scmp.ne.s32.totalorder %s61, %s75
      %p77 = scmp.eq.s32.totalorder %s35, 0
      %p78 = por %p76, %p77
      %p79 = scmp.lt.s32.totalorder %s29, 1
      %s80 = scalar_select %p79, %s29, 1
      %p81 = scmp.lt.s32.totalorder %s36, 1
      %s82 = scalar_select %p81, %s36, 1
      %s83 = ssub.s32 %s80, %s82
      %p84 = scmp.eq.s32.totalorder %s83, 0
      %s86 = sadd.s32 %s85, 1
      %s87 = scalar_select %p84, %s85, %s86
      %p90 = pneg %p84
      %p91 = scmp.eq.s32.totalorder %s29, 2
      %p92 = por %p90, %p91
      %p93 = scmp.ne.s32.totalorder %s85, %s88
      %p94 = scmp.eq.s32.totalorder %s29, 0
      %p95 = por %p93, %p94
      %p96 = scmp.ne.s32.totalorder %s85, %s88
      %p97 = scmp.eq.s32.totalorder %s34, 2
      %p98 = por %p96, %p97
      %p99 = scmp.ne.s32.totalorder %s88, %s89
      %p100 = scmp.eq.s32.totalorder %s34, 0
      %p101 = por %p99, %p100
      %p102 = scmp.ne.s32.totalorder %s88, %s89
      %p103 = scmp.eq.s32.totalorder %s35, 2
      %p104 = por %p102, %p103
      %p106 = scmp.ne.s32.totalorder %s89, %s105
      %p107 = scmp.eq.s32.totalorder %s35, 0
      %p108 = por %p106, %p107
      %p109 = scmp.lt.s32.totalorder %s29, 1
      %s110 = scalar_select %p109, %s29, 1
      %p111 = scmp.lt.s32.totalorder %s36, 1
      %s112 = scalar_select %p111, %s36, 1
      %s113 = ssub.s32 %s110, %s112
      %p114 = scmp.eq.s32.totalorder %s113, 0
      %s116 = sadd.s32 %s115, 1
      %s117 = scalar_select %p114, %s115, %s116
      %p120 = pneg %p114
      %p121 = scmp.eq.s32.totalorder %s29, 2
      %p122 = por %p120, %p121
      %p123 = scmp.ne.s32.totalorder %s115, %s118
      %p124 = scmp.eq.s32.totalorder %s29, 0
      %p125 = por %p123, %p124
      %p126 = scmp.ne.s32.totalorder %s115, %s118
      %p127 = scmp.eq.s32.totalorder %s34, 2
      %p128 = por %p126, %p127
      %p129 = scmp.ne.s32.totalorder %s118, %s119
      %p130 = scmp.eq.s32.totalorder %s34, 0
      %p131 = por %p129, %p130
      %p132 = scmp.ne.s32.totalorder %s118, %s119
      %p133 = scmp.eq.s32.totalorder %s35, 2
      %p134 = por %p132, %p133
      %p136 = scmp.ne.s32.totalorder %s119, %s135
      %p137 = scmp.eq.s32.totalorder %s35, 0
      %p138 = por %p136, %p137
      %s139 = ssub.s32 %s29, 2
      %p140 = scmp.gt.s32.totalorder %s139, 0
      %s141 = scalar_select %p140, %s139, 0
      %s142 = ssub.s32 %s36, 2
      %p143 = scmp.gt.s32.totalorder %s142, 0
      %s144 = scalar_select %p143, %s142, 0
      %s145 = ssub.s32 %s141, %s144
      %p146 = scmp.eq.s32.totalorder %s145, 0
      %s148 = sadd.s32 %s147, 1
      %s149 = scalar_select %p146, %s147, %s148
      %p152 = pneg %p146
      %p153 = scmp.eq.s32.totalorder %s29, 2
      %p154 = por %p152, %p153
      %p155 = scmp.ne.s32.totalorder %s147, %s150
      %p156 = scmp.eq.s32.totalorder %s29, 0
      %p157 = por %p155, %p156
      %p158 = scmp.ne.s32.totalorder %s147, %s150
      %p159 = scmp.eq.s32.totalorder %s34, 2
      %p160 = por %p158, %p159
      %p161 = scmp.ne.s32.totalorder %s150, %s151
      %p162 = scmp.eq.s32.totalorder %s34, 0
      %p163 = por %p161, %p162
      %p164 = scmp.ne.s32.totalorder %s150, %s151
      %p165 = scmp.eq.s32.totalorder %s35, 2
      %p166 = por %p164, %p165
      %p168 = scmp.ne.s32.totalorder %s151, %s167
      %p169 = scmp.eq.s32.totalorder %s35, 0
      %p170 = por %p168, %p169
      %s171 = ssub.s32 %s29, 2
      %p172 = scmp.gt.s32.totalorder %s171, 0
      %s173 = scalar_select %p172, %s171, 0
      %s174 = ssub.s32 %s36, 2
      %p175 = scmp.gt.s32.totalorder %s174, 0
      %s176 = scalar_select %p175, %s174, 0
      %s177 = ssub.s32 %s173, %s176
      %p178 = scmp.eq.s32.totalorder %s177, 0
      %s180 = sadd.s32 %s179, 1
      %s181 = scalar_select %p178, %s179, %s180
      %p184 = pneg %p178
      %p185 = scmp.eq.s32.totalorder %s29, 2
      %p186 = por %p184, %p185
      %p187 = scmp.ne.s32.totalorder %s179, %s182
      %p188 = scmp.eq.s32.totalorder %s29, 0
      %p189 = por %p187, %p188
      %p190 = scmp.ne.s32.totalorder %s179, %s182
      %p191 = scmp.eq.s32.totalorder %s34, 2
      %p192 = por %p190, %p191
      %p193 = scmp.ne.s32.totalorder %s182, %s183
      %p194 = scmp.eq.s32.totalorder %s34, 0
      %p195 = por %p193, %p194
      %p196 = scmp.ne.s32.totalorder %s182, %s183
      %p197 = scmp.eq.s32.totalorder %s35, 2
      %p198 = por %p196, %p197
      %p200 = scmp.ne.s32.totalorder %s183, %s199
      %p201 = scmp.eq.s32.totalorder %s35, 0
      %p202 = por %p200, %p201
      %s203 = ssub.s32 %s29, 2
      %p204 = scmp.gt.s32.totalorder %s203, 0
      %s205 = scalar_select %p204, %s203, 0
      %s206 = ssub.s32 %s36, 2
      %p207 = scmp.gt.s32.totalorder %s206, 0
      %s208 = scalar_select %p207, %s206, 0
      %s209 = ssub.s32 %s205, %s208
      %p210 = scmp.eq.s32.totalorder %s209, 0
      %s212 = sadd.s32 %s211, 1
      %s213 = scalar_select %p210, %s211, %s212
      %p216 = pneg %p210
      %p217 = scmp.eq.s32.totalorder %s29, 2
      %p218 = por %p216, %p217
      %p219 = scmp.ne.s32.totalorder %s211, %s214
      %p220 = scmp.eq.s32.totalorder %s29, 0
      %p221 = por %p219, %p220
      %p222 = scmp.ne.s32.totalorder %s211, %s214
      %p223 = scmp.eq.s32.totalorder %s34, 2
      %p224 = por %p222, %p223
      %p225 = scmp.ne.s32.totalorder %s214, %s215
      %p226 = scmp.eq.s32.totalorder %s34, 0
      %p227 = por %p225, %p226
      %p228 = scmp.ne.s32.totalorder %s214, %s215
      %p229 = scmp.eq.s32.totalorder %s35, 2
      %p230 = por %p228, %p229
      %p232 = scmp.ne.s32.totalorder %s215, %s231
      %p233 = scmp.eq.s32.totalorder %s35, 0
      %p234 = por %p232, %p233
      %s236 = sadd.s32 %s235, 1
      %p239 = scmp.eq.s32.totalorder %s29, 2
      %p240 = scmp.ne.s32.totalorder %s235, %s237
      %p241 = scmp.eq.s32.totalorder %s29, 0
      %p242 = por %p240, %p241
      %p243 = scmp.ne.s32.totalorder %s235, %s237
      %p244 = scmp.eq.s32.totalorder %s34, 2
      %p245 = por %p243, %p244
      %p246 = scmp.ne.s32.totalorder %s237, %s238
      %p247 = scmp.eq.s32.totalorder %s34, 0
      %p248 = por %p246, %p247
      %p249 = scmp.ne.s32.totalorder %s237, %s238
      %p250 = scmp.eq.s32.totalorder %s35, 2
      %p251 = por %p249, %p250
      %p253 = scmp.ne.s32.totalorder %s238, %s252
      %p254 = scmp.eq.s32.totalorder %s35, 0
      %p255 = por %p253, %p254
      %s257 = sadd.s32 %s256, 1
      %p260 = scmp.eq.s32.totalorder %s29, 2
      %p261 = scmp.ne.s32.totalorder %s256, %s258
      %p262 = scmp.eq.s32.totalorder %s29, 0
      %p263 = por %p261, %p262
      %p264 = scmp.ne.s32.totalorder %s256, %s258
      %p265 = scmp.eq.s32.totalorder %s34, 2
      %p266 = por %p264, %p265
      %p267 = scmp.ne.s32.totalorder %s258, %s259
      %p268 = scmp.eq.s32.totalorder %s34, 0
      %p269 = por %p267, %p268
      %p270 = scmp.ne.s32.totalorder %s258, %s259
      %p271 = scmp.eq.s32.totalorder %s35, 2
      %p272 = por %p270, %p271
      %p274 = scmp.ne.s32.totalorder %s259, %s273
      %p275 = scmp.eq.s32.totalorder %s35, 0
      %p276 = por %p274, %p275
      %p277 = scmp.le.s32.totalorder 1, %s29
      %p278 = scmp.lt.s32.totalorder %s29, 4
      %p279 = pnand %p277, %p278
      %p280 = pneg %p279
      // Predicated region
      $region9: #{decoder_forward.1} parent=5 // pred_check
        _
      $region10: #{decoder_forward.1} parent=5 // pred_check_branch
        %282 = sbr.rel (%p279) target = $region12
      $region11: #{decoder_forward.1} parent=5 // pred_region
        %s283 = ssub.s32 %s29, 1
        // Predicated region
        $region13: #{decoder_forward.1} parent=11 // pred_check
          %p284 = pneg %p50
        $region14: #{decoder_forward.1} parent=11 // pred_check_branch
          %286 = sbr.rel (%p284) target = $region16
        $region15: #{decoder_forward.1} parent=11 // pred_region
          _
        $region16: #{decoder_forward.1} parent=11 // pred_fallthru
          _
        // Predicated region
        $region17: #{decoder_forward.1} parent=11 // pred_check
          %p287 = pneg %p71
        $region18: #{decoder_forward.1} parent=11 // pred_check_branch
          %289 = sbr.rel (%p287) target = $region20
        $region19: #{decoder_forward.1} parent=11 // pred_region
          _
        $region20: #{decoder_forward.1} parent=11 // pred_fallthru
          _
      $region12: #{decoder_forward.1} parent=5 // pred_fallthru
        _
      %p290 = scmp.lt.s32.totalorder %s29, 3
      // Predicated region
      $region21: #{decoder_forward.1} parent=5 // pred_check
        %p291 = pneg %p290
      $region22: #{decoder_forward.1} parent=5 // pred_check_branch
        %293 = sbr.rel (%p291) target = $region24
      $region23: #{decoder_forward.1} parent=5 // pred_region
        // Predicated region
        $region25: #{decoder_forward.1} parent=23 // pred_check
          %p294 = pneg %p95
        $region26: #{decoder_forward.1} parent=23 // pred_check_branch
          %296 = sbr.rel (%p294) target = $region28
        $region27: #{decoder_forward.1} parent=23 // pred_region
          %s297 = sand.u32 %s85, 1
          %s298 = scalar_lea.sflag [#allocation8], %s297
          %s299 = sand.u32 %s85, 1
          %s300 = smul.addr %s299, 512
          %s301 = scalar_lea.vmem [#allocation7], %s300
          %p302 = scmp.lt.s32.totalorder %s29, 1
          %s303 = scalar_select %p302, %s29, 1
          %s305 = ssub.s32 8192, 8192
          %306 = vsyncadd %s298, %s305
          %s307 = smul.addr %s303, 128
          %s308 = smul.addr %s307, 64
          %s309 = scalar_lea.hbm %s4, %s308
          %s310 = sshll.u32 %s301, 4
          %s311 = int_to_ptr.vmem [resolvable:$true] %s310
          %316 = dma.hbm_to_vmem [thread:$0]  %s309, 8192, %s311, %s298, 256, 256, 16
        $region28: #{decoder_forward.1} parent=23 // pred_fallthru
          _
        // Predicated region
        $region29: #{decoder_forward.1} parent=23 // pred_check
          %p317 = pneg %p125
        $region30: #{decoder_forward.1} parent=23 // pred_check_branch
          %319 = sbr.rel (%p317) target = $region32
        $region31: #{decoder_forward.1} parent=23 // pred_region
          %p320 = scmp.lt.s32.totalorder %s29, 1
          %s321 = scalar_select %p320, %s29, 1
          %p322 = scmp.lt.s32.totalorder %s321, 1
          %s323 = scalar_select %p322, %s321, 1
          %s324 = smul.addr %s323, 4
          %s325 = scalar_lea.vmem %s5, %s324
          %p326 = scmp.lt.s32.totalorder %s29, 1
          %s327 = scalar_select %p326, %s29, 1
        $region32: #{decoder_forward.1} parent=23 // pred_fallthru
          _
        // Predicated region
        $region33: #{decoder_forward.1} parent=23 // pred_check
          %p328 = pneg %p157
        $region34: #{decoder_forward.1} parent=23 // pred_check_branch
          %330 = sbr.rel (%p328) target = $region36
        $region35: #{decoder_forward.1} parent=23 // pred_region
          %s331 = sand.u32 %s147, 1
          %s332 = scalar_lea.sflag [#allocation10], %s331
          %s333 = sand.u32 %s147, 1
          %s334 = smul.addr %s333, 64
          %s335 = scalar_lea.vmem [#allocation9], %s334
          %s336 = ssub.s32 %s29, 2
          %p337 = scmp.gt.s32.totalorder %s336, 0
          %s338 = scalar_select %p337, %s336, 0
          %s340 = ssub.s32 1024, 1024
          %341 = vsyncadd %s332, %s340
          %s342 = smul.addr %s338, 64
          %s343 = scalar_lea.hbm %s6, %s342
          %s344 = sshll.u32 %s335, 4
          %s345 = int_to_ptr.vmem [resolvable:$true] %s344
          %350 = dma.hbm_to_vmem [thread:$0]  %s343, 1024, %s345, %s332, 64, 64, 4
        $region36: #{decoder_forward.1} parent=23 // pred_fallthru
          _
        // Predicated region
        $region37: #{decoder_forward.1} parent=23 // pred_check
          %p351 = pneg %p189
        $region38: #{decoder_forward.1} parent=23 // pred_check_branch
          %353 = sbr.rel (%p351) target = $region40
        $region39: #{decoder_forward.1} parent=23 // pred_region
          %s354 = ssub.s32 %s29, 2
          %p355 = scmp.gt.s32.totalorder %s354, 0
          %s356 = scalar_select %p355, %s354, 0
          %p357 = scmp.lt.s32.totalorder %s356, 0
          %s358 = scalar_select %p357, %s356, 0
          %s359 = scalar_lea.vmem %s7, %s358
          %s360 = ssub.s32 %s29, 2
          %p361 = scmp.gt.s32.totalorder %s360, 0
          %s362 = scalar_select %p361, %s360, 0
        $region40: #{decoder_forward.1} parent=23 // pred_fallthru
          _
      $region24: #{decoder_forward.1} parent=5 // pred_fallthru
        _
      %p363 = scmp.le.s32.totalorder 1, %s29
      %p364 = scmp.lt.s32.totalorder %s29, 4
      %p365 = pnand %p363, %p364
      %p366 = pneg %p365
      // Predicated region
      $region41: #{decoder_forward.1} parent=5 // pred_check
        _
      $region42: #{decoder_forward.1} parent=5 // pred_check_branch
        %368 = sbr.rel (%p365) target = $region44
      $region43: #{decoder_forward.1} parent=5 // pred_region
        %s369 = ssub.s32 %s29, 1
        %s370 = sand.u32 %s88, 1
        %s371 = scalar_lea.sflag [#allocation8], %s370
        %s372 = sand.u32 %s88, 1
        %s373 = smul.addr %s372, 512
        %s374 = scalar_lea.vmem [#allocation7], %s373
        // Predicated region
        $region45: #{decoder_forward.1} parent=43 // pred_check
          %p375 = pneg %p101
        $region46: #{decoder_forward.1} parent=43 // pred_check_branch
          %377 = sbr.rel (%p375) target = $region48
        $region47: #{decoder_forward.1} parent=43 // pred_region
          %378 = dma.done %s371, 8192
        $region48: #{decoder_forward.1} parent=43 // pred_fallthru
          _
        %s379 = sand.u32 %s150, 1
        %s380 = scalar_lea.sflag [#allocation10], %s379
        %s381 = sand.u32 %s150, 1
        %s382 = smul.addr %s381, 64
        %s383 = scalar_lea.vmem [#allocation9], %s382
        // Predicated region
        $region49: #{decoder_forward.1} parent=43 // pred_check
          %p384 = pneg %p163
        $region50: #{decoder_forward.1} parent=43 // pred_check_branch
          %386 = sbr.rel (%p384) target = $region52
        $region51: #{decoder_forward.1} parent=43 // pred_region
          %387 = dma.done %s380, 1024
        $region52: #{decoder_forward.1} parent=43 // pred_fallthru
          _
        %p388 = pneg %p50
        %p389 = pneg %p47
        %p390 = pneg %p71
        %p391 = pneg %p68
        %s392 = sand.u32 %s88, 1
        %s393 = scalar_lea.sflag [#allocation8], %s392
        %s394 = sand.u32 %s88, 1
        %s395 = smul.addr %s394, 512
        %s396 = scalar_lea.vmem [#allocation7], %s395
        %p397 = pneg %p101
        %p398 = pneg %p98
        %p399 = scmp.lt.s32.totalorder %s34, 1
        %s400 = scalar_select %p399, %s34, 1
        %p401 = scmp.lt.s32.totalorder %s400, 1
        %s402 = scalar_select %p401, %s400, 1
        %s403 = smul.addr %s402, 4
        %s404 = scalar_lea.vmem %s5, %s403
        %p405 = pneg %p131
        %p406 = pneg %p128
        %s407 = sand.u32 %s150, 1
        %s408 = scalar_lea.sflag [#allocation10], %s407
        %s409 = sand.u32 %s150, 1
        %s410 = smul.addr %s409, 64
        %s411 = scalar_lea.vmem [#allocation9], %s410
        %p412 = pneg %p163
        %p413 = pneg %p160
        %s414 = ssub.s32 %s34, 2
        %p415 = scmp.gt.s32.totalorder %s414, 0
        %s416 = scalar_select %p415, %s414, 0
        %p417 = scmp.lt.s32.totalorder %s416, 0
        %s418 = scalar_select %p417, %s416, 0
        %s419 = scalar_lea.vmem %s7, %s418
        %p420 = pneg %p195
        %p421 = pneg %p192
        %p422 = pneg %p227
        %p423 = pneg %p224
        %s424 = ssub.s32 %s34, 2
        %p425 = scmp.gt.s32.totalorder %s424, 0
        %s426 = scalar_select %p425, %s424, 0
        %p427 = scmp.lt.s32.totalorder %s426, 0
        %s428 = scalar_select %p427, %s426, 0
        %s429 = smul.addr %s428, 8
        %s430 = scalar_lea.vmem %s8, %s429
        %p431 = pneg %p248
        %p432 = pneg %p245
        %p433 = pneg %p269
        %p434 = pneg %p266
        %p435 = scmp.lt.s32.totalorder %s34, 1
        %s436 = scalar_select %p435, %s34, 1
        %p437 = scmp.lt.s32.totalorder %s34, 1
        %s438 = scalar_select %p437, %s34, 1
        %p439 = scmp.lt.s32.totalorder %s438, 1
        %s440 = scalar_select %p439, %s438, 1
        %s441 = smul.addr %s440, 4
        %s442 = scalar_lea.vmem %s5, %s441
        %p443 = scmp.lt.s32.totalorder %s34, 1
        %s444 = scalar_select %p443, %s34, 1
        %s445 = ssub.s32 %s34, 2
        %p446 = scmp.gt.s32.totalorder %s445, 0
        %s447 = scalar_select %p446, %s445, 0
        %s448 = ssub.s32 %s34, 2
        %p449 = scmp.gt.s32.totalorder %s448, 0
        %s450 = scalar_select %p449, %s448, 0
        %p451 = scmp.lt.s32.totalorder %s450, 0
        %s452 = scalar_select %p451, %s450, 0
        %s453 = scalar_lea.vmem %s7, %s452
        %s454 = ssub.s32 %s34, 2
        %p455 = scmp.gt.s32.totalorder %s454, 0
        %s456 = scalar_select %p455, %s454, 0
        %s457 = ssub.s32 %s34, 2
        %p458 = scmp.gt.s32.totalorder %s457, 0
        %s459 = scalar_select %p458, %s457, 0
        %p460 = scmp.lt.s32.totalorder %s459, 0
        %s461 = scalar_select %p460, %s459, 0
        %s462 = smul.addr %s461, 8
        %s463 = scalar_lea.vmem %s8, %s462
        %s464 = ssub.s32 %s34, 2
        %p465 = scmp.gt.s32.totalorder %s464, 0
        %s466 = scalar_select %p465, %s464, 0
        %p468 = scmp.eq.s32.totalorder %s34, 0
        // Predicated region
        $region53: #{decoder_forward.1} parent=43 // pred_check
          %p469 = pneg %p468
        $region54: #{decoder_forward.1} parent=43 // pred_check_branch
          %471 = sbr.rel (%p469) target = $region56
        $region55: #{decoder_forward.1} parent=43 // pred_region
          %472 = vst [vmem:[#allocation2] sm:$0xff] 0
          %s473 = sld [smem:[#allocation6]]
          %s474 = sld [smem:[#allocation6 + $0x1]]
          %s475 = smul.addr %s473, 16
          %s476 = scalar_lea.hbm %s1, %s475
          // Predicated region
          $region57: #{decoder_forward.1} parent=55 // pred_check
            _
          $region58: #{decoder_forward.1} parent=55 // pred_check_branch
            %478 = sbr.rel target = $region60
          $region59: #{decoder_forward.1} parent=55 // pred_region
            %479 = sst [smem:[#allocation13]] [#allocation12]
            %480 = sst [smem:[#allocation14]] [#allocation11]
          $region60: #{decoder_forward.1} parent=55 // pred_fallthru
            _
          %482 = shalt.err (0)
          %s484 = sshll.u32 [#allocation3], 4
          %s485 = int_to_ptr.vmem [resolvable:$true] %s484
          %487 = dma.hbm_to_vmem [thread:$0]  %s476, 16, %s485, [#allocation4]
          %s488 = smul.addr %s474, 16
          %s489 = scalar_lea.hbm %s1, %s488
          %s490 = scalar_lea.vmem [#allocation3], 1
          %s491 = scalar_lea.sflag [#allocation4], 1
          // Predicated region
          $region61: #{decoder_forward.1} parent=55 // pred_check
            _
          $region62: #{decoder_forward.1} parent=55 // pred_check_branch
            %493 = sbr.rel target = $region64
          $region63: #{decoder_forward.1} parent=55 // pred_region
            %494 = sst [smem:[#allocation13]] [#allocation16]
            %495 = sst [smem:[#allocation14]] [#allocation15]
          $region64: #{decoder_forward.1} parent=55 // pred_fallthru
            _
          %497 = shalt.err (0)
          %s499 = sshll.u32 %s490, 4
          %s500 = int_to_ptr.vmem [resolvable:$true] %s499
          %502 = dma.hbm_to_vmem [thread:$0]  %s489, 16, %s500, %s491
          %s503 = smul.u32 1, 1
          %s504 = sshll.u32 %s503, 4
          %505 = dma.done [#allocation4], %s504
          %s506 = sshll.u32 %s503, 4
          %507 = dma.done %s491, %s506
          %v508 = vld [vmem:[#allocation3] sm:$0xff]
          %v509 = vlaneseq
          %v510 = vshrl.u32 %v509, 7
          %vm511 = vcmp.lt.s32.totalorder %v510, 2
          %v512 = vsel %vm511, %v508, 0.0
          %v513 = vpack.c.bf16 %v512, %v512
          %514 = vst [vmem:[#allocation2] sm:$0xf] %v513
        $region56: #{decoder_forward.1} parent=43 // pred_fallthru
          _
        %p515 = scmp.lt.s32.totalorder %s34, 2
        // Predicated region
        $region65: #{decoder_forward.1} parent=43 // pred_check
          %p516 = pneg %p515
        $region66: #{decoder_forward.1} parent=43 // pred_check_branch
          %518 = sbr.rel (%p516) target = $region68
        $region67: #{decoder_forward.1} parent=43 // pred_region
          %s519 = smul.u32 %s34, 8
          %s520 = scalar_lea.vmem %s2, %s519
          %v521 = vld [vmem:[%s520] sm:$0xff]
          %v522 = vpack.c.bf16 %v521, %v521
          %523 = vst [vmem:[#allocation2 + $0x4] sm:$0xf] %v522
          %v524 = vld [vmem:[#allocation2] sm:$0xff]
          %v525 = vld [vmem:[%s374] sm:$0xff]
          %v526 = vld [vmem:[%s374 + $0x8] sm:$0xff]
          %v527 = vld [vmem:[%s374 + $0x10] sm:$0xff]
          %v528 = vld [vmem:[%s374 + $0x18] sm:$0xff]
          %v529 = vld [vmem:[%s374 + $0x20] sm:$0xff]
          %v530 = vld [vmem:[%s374 + $0x28] sm:$0xff]
          %v531 = vld [vmem:[%s374 + $0x30] sm:$0xff]
          %v532 = vld [vmem:[%s374 + $0x38] sm:$0xff]
          %v533 = vld [vmem:[%s374 + $0x40] sm:$0xff]
          %v534 = vld [vmem:[%s374 + $0x48] sm:$0xff]
          %v535 = vld [vmem:[%s374 + $0x50] sm:$0xff]
          %v536 = vld [vmem:[%s374 + $0x58] sm:$0xff]
          %v537 = vld [vmem:[%s374 + $0x60] sm:$0xff]
          %v538 = vld [vmem:[%s374 + $0x68] sm:$0xff]
          %v539 = vld [vmem:[%s374 + $0x70] sm:$0xff]
          %v540 = vld [vmem:[%s374 + $0x78] sm:$0xff]
          %v541 = vld [vmem:[%s374 + $0x80] sm:$0xff]
          %v542 = vld [vmem:[%s374 + $0x88] sm:$0xff]
          %v543 = vld [vmem:[%s374 + $0x90] sm:$0xff]
          %v544 = vld [vmem:[%s374 + $0x98] sm:$0xff]
          %v545 = vld [vmem:[%s374 + $0xa0] sm:$0xff]
          %v546 = vld [vmem:[%s374 + $0xa8] sm:$0xff]
          %v547 = vld [vmem:[%s374 + $0xb0] sm:$0xff]
          %v548 = vld [vmem:[%s374 + $0xb8] sm:$0xff]
          %v549 = vld [vmem:[%s374 + $0xc0] sm:$0xff]
          %v550 = vld [vmem:[%s374 + $0xc8] sm:$0xff]
          %v551 = vld [vmem:[%s374 + $0xd0] sm:$0xff]
          %v552 = vld [vmem:[%s374 + $0xd8] sm:$0xff]
          %v553 = vld [vmem:[%s374 + $0xe0] sm:$0xff]
          %v554 = vld [vmem:[%s374 + $0xe8] sm:$0xff]
          %v555 = vld [vmem:[%s374 + $0xf0] sm:$0xff]
          %v556 = vld [vmem:[%s374 + $0xf8] sm:$0xff]
          %v557 = vld [vmem:[%s374 + $0x100] sm:$0xff]
          %v558 = vld [vmem:[%s374 + $0x108] sm:$0xff]
          %v559 = vld [vmem:[%s374 + $0x110] sm:$0xff]
          %v560 = vld [vmem:[%s374 + $0x118] sm:$0xff]
          %v561 = vld [vmem:[%s374 + $0x120] sm:$0xff]
          %v562 = vld [vmem:[%s374 + $0x128] sm:$0xff]
          %v563 = vld [vmem:[%s374 + $0x130] sm:$0xff]
          %v564 = vld [vmem:[%s374 + $0x138] sm:$0xff]
          %v565 = vld [vmem:[%s374 + $0x140] sm:$0xff]
          %v566 = vld [vmem:[%s374 + $0x148] sm:$0xff]
          %v567 = vld [vmem:[%s374 + $0x150] sm:$0xff]
          %v568 = vld [vmem:[%s374 + $0x158] sm:$0xff]
          %v569 = vld [vmem:[%s374 + $0x160] sm:$0xff]
          %v570 = vld [vmem:[%s374 + $0x168] sm:$0xff]
          %v571 = vld [vmem:[%s374 + $0x170] sm:$0xff]
          %v572 = vld [vmem:[%s374 + $0x178] sm:$0xff]
          %v573 = vld [vmem:[%s374 + $0x180] sm:$0xff]
          %v574 = vld [vmem:[%s374 + $0x188] sm:$0xff]
          %v575 = vld [vmem:[%s374 + $0x190] sm:$0xff]
          %v576 = vld [vmem:[%s374 + $0x198] sm:$0xff]
          %v577 = vld [vmem:[%s374 + $0x1a0] sm:$0xff]
          %v578 = vld [vmem:[%s374 + $0x1a8] sm:$0xff]
          %v579 = vld [vmem:[%s374 + $0x1b0] sm:$0xff]
          %v580 = vld [vmem:[%s374 + $0x1b8] sm:$0xff]
          %v581 = vld [vmem:[%s374 + $0x1c0] sm:$0xff]
          %v582 = vld [vmem:[%s374 + $0x1c8] sm:$0xff]
          %v583 = vld [vmem:[%s374 + $0x1d0] sm:$0xff]
          %v584 = vld [vmem:[%s374 + $0x1d8] sm:$0xff]
          %v585 = vld [vmem:[%s374 + $0x1e0] sm:$0xff]
          %v586 = vld [vmem:[%s374 + $0x1e8] sm:$0xff]
          %v587 = vld [vmem:[%s374 + $0x1f0] sm:$0xff]
          %v588 = vld [vmem:[%s374 + $0x1f8] sm:$0xff]
          %v589 = vld [vmem:[%s442] sm:$0xf]
          %v591 = vlaneseq
          %v592 = vshrl.u32 %v591, 7
          %v593 = vsub.s32 0, %v592
          %v594 = vrot.slane %v589, %v593
          %v595 = vlaneseq
          %v596 = vshrl.u32 %v595, 7
          %v597 = vsub.s32 1, %v596
          %v598 = vrot.slane %v589, %v597
          %v599 = vlaneseq
          %v600 = vshrl.u32 %v599, 7
          %v601 = vsub.s32 2, %v600
          %v602 = vrot.slane %v589, %v601
          %v603 = vlaneseq
          %v604 = vshrl.u32 %v603, 7
          %v605 = vsub.s32 3, %v604
          %v606 = vrot.slane %v589, %v605
          %v612 = vunpack.c.l.b16 %v524
          %v613 = vunpack.c.h.b16 %v524
          %v614 = vpack.c.b16 %v612, %v612
          %v615 = vpack.c.b16 %v613, %v613
          %v682 = vunpack.c.l.b16 %v525
          %v683 = vunpack.c.h.b16 %v525
          %v684 = vunpack.c.l.b16 %v526
          %v685 = vunpack.c.h.b16 %v526
          %v686 = vunpack.c.l.b16 %v527
          %v687 = vunpack.c.h.b16 %v527
          %v688 = vunpack.c.l.b16 %v528
          %v689 = vunpack.c.h.b16 %v528
          %v690 = vunpack.c.l.b16 %v529
          %v691 = vunpack.c.h.b16 %v529
          %v692 = vunpack.c.l.b16 %v530
          %v693 = vunpack.c.h.b16 %v530
          %v694 = vunpack.c.l.b16 %v531
          %v695 = vunpack.c.h.b16 %v531
          %v696 = vunpack.c.l.b16 %v532
          %v697 = vunpack.c.h.b16 %v532
          %v698 = vunpack.c.l.b16 %v533
          %v699 = vunpack.c.h.b16 %v533
          %v700 = vunpack.c.l.b16 %v534
          %v701 = vunpack.c.h.b16 %v534
          %v702 = vunpack.c.l.b16 %v535
          %v703 = vunpack.c.h.b16 %v535
          %v704 = vunpack.c.l.b16 %v536
          %v705 = vunpack.c.h.b16 %v536
          %v706 = vunpack.c.l.b16 %v537
          %v707 = vunpack.c.h.b16 %v537
          %v708 = vunpack.c.l.b16 %v538
          %v709 = vunpack.c.h.b16 %v538
          %v710 = vunpack.c.l.b16 %v539
          %v711 = vunpack.c.h.b16 %v539
          %v712 = vunpack.c.l.b16 %v540
          %v713 = vunpack.c.h.b16 %v540
          %v714 = vunpack.c.l.b16 %v541
          %v715 = vunpack.c.h.b16 %v541
          %v716 = vunpack.c.l.b16 %v542
          %v717 = vunpack.c.h.b16 %v542
          %v718 = vunpack.c.l.b16 %v543
          %v719 = vunpack.c.h.b16 %v543
          %v720 = vunpack.c.l.b16 %v544
          %v721 = vunpack.c.h.b16 %v544
          %v722 = vunpack.c.l.b16 %v545
          %v723 = vunpack.c.h.b16 %v545
          %v724 = vunpack.c.l.b16 %v546
          %v725 = vunpack.c.h.b16 %v546
          %v726 = vunpack.c.l.b16 %v547
          %v727 = vunpack.c.h.b16 %v547
          %v728 = vunpack.c.l.b16 %v548
          %v729 = vunpack.c.h.b16 %v548
          %v730 = vunpack.c.l.b16 %v549
          %v731 = vunpack.c.h.b16 %v549
          %v732 = vunpack.c.l.b16 %v550
          %v733 = vunpack.c.h.b16 %v550
          %v734 = vunpack.c.l.b16 %v551
          %v735 = vunpack.c.h.b16 %v551
          %v736 = vunpack.c.l.b16 %v552
          %v737 = vunpack.c.h.b16 %v552
          %v738 = vunpack.c.l.b16 %v553
          %v739 = vunpack.c.h.b16 %v553
          %v740 = vunpack.c.l.b16 %v554
          %v741 = vunpack.c.h.b16 %v554
          %v742 = vunpack.c.l.b16 %v555
          %v743 = vunpack.c.h.b16 %v555
          %v744 = vunpack.c.l.b16 %v556
          %v745 = vunpack.c.h.b16 %v556
          %v746 = vunpack.c.l.b16 %v557
          %v747 = vunpack.c.h.b16 %v557
          %v748 = vunpack.c.l.b16 %v558
          %v749 = vunpack.c.h.b16 %v558
          %v750 = vunpack.c.l.b16 %v559
          %v751 = vunpack.c.h.b16 %v559
          %v752 = vunpack.c.l.b16 %v560
          %v753 = vunpack.c.h.b16 %v560
          %v754 = vunpack.c.l.b16 %v561
          %v755 = vunpack.c.h.b16 %v561
          %v756 = vunpack.c.l.b16 %v562
          %v757 = vunpack.c.h.b16 %v562
          %v758 = vunpack.c.l.b16 %v563
          %v759 = vunpack.c.h.b16 %v563
          %v760 = vunpack.c.l.b16 %v564
          %v761 = vunpack.c.h.b16 %v564
          %v762 = vunpack.c.l.b16 %v565
          %v763 = vunpack.c.h.b16 %v565
          %v764 = vunpack.c.l.b16 %v566
          %v765 = vunpack.c.h.b16 %v566
          %v766 = vunpack.c.l.b16 %v567
          %v767 = vunpack.c.h.b16 %v567
          %v768 = vunpack.c.l.b16 %v568
          %v769 = vunpack.c.h.b16 %v568
          %v770 = vunpack.c.l.b16 %v569
          %v771 = vunpack.c.h.b16 %v569
          %v772 = vunpack.c.l.b16 %v570
          %v773 = vunpack.c.h.b16 %v570
          %v774 = vunpack.c.l.b16 %v571
          %v775 = vunpack.c.h.b16 %v571
          %v776 = vunpack.c.l.b16 %v572
          %v777 = vunpack.c.h.b16 %v572
          %v778 = vunpack.c.l.b16 %v573
          %v779 = vunpack.c.h.b16 %v573
          %v780 = vunpack.c.l.b16 %v574
          %v781 = vunpack.c.h.b16 %v574
          %v782 = vunpack.c.l.b16 %v575
          %v783 = vunpack.c.h.b16 %v575
          %v784 = vunpack.c.l.b16 %v576
          %v785 = vunpack.c.h.b16 %v576
          %v786 = vunpack.c.l.b16 %v577
          %v787 = vunpack.c.h.b16 %v577
          %v788 = vunpack.c.l.b16 %v578
          %v789 = vunpack.c.h.b16 %v578
          %v790 = vunpack.c.l.b16 %v579
          %v791 = vunpack.c.h.b16 %v579
          %v792 = vunpack.c.l.b16 %v580
          %v793 = vunpack.c.h.b16 %v580
          %v794 = vunpack.c.l.b16 %v581
          %v795 = vunpack.c.h.b16 %v581
          %v796 = vunpack.c.l.b16 %v582
          %v797 = vunpack.c.h.b16 %v582
          %v798 = vunpack.c.l.b16 %v583
          %v799 = vunpack.c.h.b16 %v583
          %v800 = vunpack.c.l.b16 %v584
          %v801 = vunpack.c.h.b16 %v584
          %v802 = vunpack.c.l.b16 %v585
          %v803 = vunpack.c.h.b16 %v585
          %v804 = vunpack.c.l.b16 %v586
          %v805 = vunpack.c.h.b16 %v586
          %v806 = vunpack.c.l.b16 %v587
          %v807 = vunpack.c.h.b16 %v587
          %v808 = vunpack.c.l.b16 %v588
          %v809 = vunpack.c.h.b16 %v588
          %v810 = vpack.c.b16 %v686, %v682
          %v811 = vpack.c.b16 %v687, %v683
          %v812 = vpack.c.b16 %v688, %v684
          %v813 = vpack.c.b16 %v689, %v685
          %v814 = vpack.c.b16 %v694, %v690
          %v815 = vpack.c.b16 %v695, %v691
          %v816 = vpack.c.b16 %v696, %v692
          %v817 = vpack.c.b16 %v697, %v693
          %v818 = vpack.c.b16 %v702, %v698
          %v819 = vpack.c.b16 %v703, %v699
          %v820 = vpack.c.b16 %v704, %v700
          %v821 = vpack.c.b16 %v705, %v701
          %v822 = vpack.c.b16 %v710, %v706
          %v823 = vpack.c.b16 %v711, %v707
          %v824 = vpack.c.b16 %v712, %v708
          %v825 = vpack.c.b16 %v713, %v709
          %v826 = vpack.c.b16 %v718, %v714
          %v827 = vpack.c.b16 %v719, %v715
          %v828 = vpack.c.b16 %v720, %v716
          %v829 = vpack.c.b16 %v721, %v717
          %v830 = vpack.c.b16 %v726, %v722
          %v831 = vpack.c.b16 %v727, %v723
          %v832 = vpack.c.b16 %v728, %v724
          %v833 = vpack.c.b16 %v729, %v725
          %v834 = vpack.c.b16 %v734, %v730
          %v835 = vpack.c.b16 %v735, %v731
          %v836 = vpack.c.b16 %v736, %v732
          %v837 = vpack.c.b16 %v737, %v733
          %v838 = vpack.c.b16 %v742, %v738
          %v839 = vpack.c.b16 %v743, %v739
          %v840 = vpack.c.b16 %v744, %v740
          %v841 = vpack.c.b16 %v745, %v741
          %v842 = vpack.c.b16 %v750, %v746
          %v843 = vpack.c.b16 %v751, %v747
          %v844 = vpack.c.b16 %v752, %v748
          %v845 = vpack.c.b16 %v753, %v749
          %v846 = vpack.c.b16 %v758, %v754
          %v847 = vpack.c.b16 %v759, %v755
          %v848 = vpack.c.b16 %v760, %v756
          %v849 = vpack.c.b16 %v761, %v757
          %v850 = vpack.c.b16 %v766, %v762
          %v851 = vpack.c.b16 %v767, %v763
          %v852 = vpack.c.b16 %v768, %v764
          %v853 = vpack.c.b16 %v769, %v765
          %v854 = vpack.c.b16 %v774, %v770
          %v855 = vpack.c.b16 %v775, %v771
          %v856 = vpack.c.b16 %v776, %v772
          %v857 = vpack.c.b16 %v777, %v773
          %v858 = vpack.c.b16 %v782, %v778
          %v859 = vpack.c.b16 %v783, %v779
          %v860 = vpack.c.b16 %v784, %v780
          %v861 = vpack.c.b16 %v785, %v781
          %v862 = vpack.c.b16 %v790, %v786
          %v863 = vpack.c.b16 %v791, %v787
          %v864 = vpack.c.b16 %v792, %v788
          %v865 = vpack.c.b16 %v793, %v789
          %v866 = vpack.c.b16 %v798, %v794
          %v867 = vpack.c.b16 %v799, %v795
          %v868 = vpack.c.b16 %v800, %v796
          %v869 = vpack.c.b16 %v801, %v797
          %v870 = vpack.c.b16 %v806, %v802
          %v871 = vpack.c.b16 %v807, %v803
          %v872 = vpack.c.b16 %v808, %v804
          %v873 = vpack.c.b16 %v809, %v805
          %938 = vmatprep.subr.bf16.mxu0 %v839
          %939 = vmatpush1.bf16.msra.mxu0 %v838
          %940 = vmatprep.subr.bf16.mxu0 %v835
          %941 = vmatpush1.bf16.msra.mxu0 %v834
          %942 = vmatprep.subr.bf16.mxu0 %v831
          %943 = vmatpush1.bf16.msra.mxu0 %v830
          %944 = vmatprep.subr.bf16.mxu0 %v827
          %945 = vmatpush1.bf16.msra.mxu0 %v826
          %946 = vmatprep.subr.bf16.mxu0 %v823
          %947 = vmatpush1.bf16.msra.mxu0 %v822
          %948 = vmatprep.subr.bf16.mxu0 %v819
          %949 = vmatpush1.bf16.msra.mxu0 %v818
          %950 = vmatprep.subr.bf16.mxu0 %v815
          %951 = vmatpush1.bf16.msra.mxu0 %v814
          %952 = vmatprep.subr.bf16.mxu0 %v811
          %953 = vmatpush1.bf16.msra.mxu0 %v810
          %954 = vmatprep.subr.bf16.mxu0 %v871
          %955 = vmatpush2.bf16.msra.mxu0 %v870
          %956 = vmatprep.subr.bf16.mxu0 %v867
          %957 = vmatpush2.bf16.msra.mxu0 %v866
          %958 = vmatprep.subr.bf16.mxu0 %v863
          %959 = vmatpush2.bf16.msra.mxu0 %v862
          %960 = vmatprep.subr.bf16.mxu0 %v859
          %961 = vmatpush2.bf16.msra.mxu0 %v858
          %962 = vmatprep.subr.bf16.mxu0 %v855
          %963 = vmatpush2.bf16.msra.mxu0 %v854
          %964 = vmatprep.subr.bf16.mxu0 %v851
          %965 = vmatpush2.bf16.msra.mxu0 %v850
          %966 = vmatprep.subr.bf16.mxu0 %v847
          %967 = vmatpush2.bf16.msra.mxu0 %v846
          %968 = vmatprep.subr.bf16.mxu0 %v843
          %969 = vmatpush2.bf16.msra.mxu0 %v842
          %970 = vmatprep.mubr.bf16.mxu0 %v615
          %971 = vmatmul.mubr.bf16.gmra.mxu0 %v614
          %v972 = vpop.f32.mrf.mxu0
          %v973 = vadd.f32 %v594, %v972
          %v974 = vpop.f32.mrf.mxu0
          %v975 = vadd.f32 %v598, %v974
          %v976 = vpop.f32.mrf.mxu0
          %v977 = vpop.f32.mrf.mxu0
          %978 = vdwg.mxu0
          %979 = vmatprep.subr.bf16.mxu0 %v841
          %980 = vmatpush1.bf16.msra.mxu0 %v840
          %981 = vmatprep.subr.bf16.mxu0 %v837
          %982 = vmatpush1.bf16.msra.mxu0 %v836
          %983 = vmatprep.subr.bf16.mxu0 %v833
          %984 = vmatpush1.bf16.msra.mxu0 %v832
          %985 = vmatprep.subr.bf16.mxu0 %v829
          %986 = vmatpush1.bf16.msra.mxu0 %v828
          %987 = vmatprep.subr.bf16.mxu0 %v825
          %988 = vmatpush1.bf16.msra.mxu0 %v824
          %989 = vmatprep.subr.bf16.mxu0 %v821
          %990 = vmatpush1.bf16.msra.mxu0 %v820
          %991 = vmatprep.subr.bf16.mxu0 %v817
          %992 = vmatpush1.bf16.msra.mxu0 %v816
          %993 = vmatprep.subr.bf16.mxu0 %v813
          %994 = vmatpush1.bf16.msra.mxu0 %v812
          %995 = vmatprep.subr.bf16.mxu0 %v873
          %996 = vmatpush2.bf16.msra.mxu0 %v872
          %997 = vmatprep.subr.bf16.mxu0 %v869
          %998 = vmatpush2.bf16.msra.mxu0 %v868
          %999 = vmatprep.subr.bf16.mxu0 %v865
          %1000 = vmatpush2.bf16.msra.mxu0 %v864
          %1001 = vmatprep.subr.bf16.mxu0 %v861
          %1002 = vmatpush2.bf16.msra.mxu0 %v860
          %1003 = vmatprep.subr.bf16.mxu0 %v857
          %1004 = vmatpush2.bf16.msra.mxu0 %v856
          %1005 = vmatprep.subr.bf16.mxu0 %v853
          %1006 = vmatpush2.bf16.msra.mxu0 %v852
          %1007 = vmatprep.subr.bf16.mxu0 %v849
          %1008 = vmatpush2.bf16.msra.mxu0 %v848
          %1009 = vmatprep.subr.bf16.mxu0 %v845
          %1010 = vmatpush2.bf16.msra.mxu0 %v844
          %1011 = vmatprep.mubr.bf16.mxu0 %v615
          %1012 = vmatmul.mubr.bf16.gmra.mxu0 %v614
          %v1013 = vpop.f32.mrf.mxu0
          %v1014 = vadd.f32 %v602, %v1013
          %v1015 = vpop.f32.mrf.mxu0
          %v1016 = vadd.f32 %v606, %v1015
          %v1017 = vpop.f32.mrf.mxu0
          %v1018 = vpop.f32.mrf.mxu0
          %1019 = vdwg.mxu0
          %v1020 = vxor.u32 %v973, 2147483648
          %v1021 = vmul.f32 %v1020, 1.442695
          %v1022 = vpow.pop %v1021
          %v1023 = vadd.f32 %v1022, 1.0
          %v1024 = vrcp.pop %v1023
          %v1025 = vmul.f32 1.0, %v1024
          %v1026 = vxor.u32 %v975, 2147483648
          %v1027 = vmul.f32 %v1026, 1.442695
          %v1028 = vpow.pop %v1027
          %v1029 = vadd.f32 %v1028, 1.0
          %v1030 = vrcp.pop %v1029
          %v1031 = vmul.f32 1.0, %v1030
          %v1032 = vtanh.pop %v1014
          %v1033 = vxor.u32 %v1016, 2147483648
          %v1034 = vmul.f32 %v1033, 1.442695
          %v1035 = vpow.pop %v1034
          %v1036 = vadd.f32 %v1035, 1.0
          %v1037 = vrcp.pop %v1036
          %v1038 = vmul.f32 1.0, %v1037
          %s1039 = scalar_lea.vmem %s3, %s519
          %v1040 = vld [vmem:[%s1039] sm:$0xff]
          %v1041 = vmul.f32 %v1031, %v1040
          %v1042 = vmul.f32 %v1025, %v1032
          %v1043 = vadd.f32 %v1041, %v1042
          %v1044 = vtanh.pop %v1043
          %v1045 = vmul.f32 %v1038, %v1044
          %s1046 = scalar_lea.vmem %s9, %s519
          %1047 = vst [vmem:[%s1046] sm:$0xff] %v1045
          %s1048 = scalar_lea.vmem %s10, %s519
          %1049 = vst [vmem:[%s1048] sm:$0xff] %v1043
          %v1050 = vpack.c.bf16 %v1045, %v1045
          %1051 = vst [vmem:[#allocation2] sm:$0xf] %v1050
        $region68: #{decoder_forward.1} parent=43 // pred_fallthru
          _
        %p1052 = scmp.ge.s32.totalorder %s34, 2
        // Predicated region
        $region69: #{decoder_forward.1} parent=43 // pred_check
          %p1053 = pneg %p1052
        $region70: #{decoder_forward.1} parent=43 // pred_check_branch
          %1055 = sbr.rel (%p1053) target = $region72
        $region71: #{decoder_forward.1} parent=43 // pred_region
          %v1056 = vld [vmem:[#allocation2] sm:$0xf]
          %v1057 = vld [vmem:[%s383] sm:$0xf]
          %v1058 = vld [vmem:[%s383 + $0x4] sm:$0xf]
          %v1059 = vld [vmem:[%s383 + $0x8] sm:$0xf]
          %v1060 = vld [vmem:[%s383 + $0xc] sm:$0xf]
          %v1061 = vld [vmem:[%s383 + $0x10] sm:$0xf]
          %v1062 = vld [vmem:[%s383 + $0x14] sm:$0xf]
          %v1063 = vld [vmem:[%s383 + $0x18] sm:$0xf]
          %v1064 = vld [vmem:[%s383 + $0x1c] sm:$0xf]
          %v1065 = vld [vmem:[%s383 + $0x20] sm:$0xf]
          %v1066 = vld [vmem:[%s383 + $0x24] sm:$0xf]
          %v1067 = vld [vmem:[%s383 + $0x28] sm:$0xf]
          %v1068 = vld [vmem:[%s383 + $0x2c] sm:$0xf]
          %v1069 = vld [vmem:[%s383 + $0x30] sm:$0xf]
          %v1070 = vld [vmem:[%s383 + $0x34] sm:$0xf]
          %v1071 = vld [vmem:[%s383 + $0x38] sm:$0xf]
          %v1072 = vld [vmem:[%s383 + $0x3c] sm:$0xf]
          %v1073 = vld [vmem:[%s453] sm:$0x1]
          %v1075 = vlaneseq
          %v1076 = vshrl.u32 %v1075, 7
          %v1077 = vsub.s32 0, %v1076
          %v1078 = vrot.slane %v1073, %v1077
          %v1096 = vunpack.c.l.b16 %v1057
          %v1097 = vunpack.c.l.b16 %v1058
          %v1098 = vunpack.c.l.b16 %v1059
          %v1099 = vunpack.c.l.b16 %v1060
          %v1100 = vunpack.c.l.b16 %v1061
          %v1101 = vunpack.c.l.b16 %v1062
          %v1102 = vunpack.c.l.b16 %v1063
          %v1103 = vunpack.c.l.b16 %v1064
          %v1104 = vunpack.c.l.b16 %v1065
          %v1105 = vunpack.c.l.b16 %v1066
          %v1106 = vunpack.c.l.b16 %v1067
          %v1107 = vunpack.c.l.b16 %v1068
          %v1108 = vunpack.c.l.b16 %v1069
          %v1109 = vunpack.c.l.b16 %v1070
          %v1110 = vunpack.c.l.b16 %v1071
          %v1111 = vunpack.c.l.b16 %v1072
          %v1112 = vpack.c.b16 %v1097, %v1096
          %v1113 = vpack.c.b16 %v1099, %v1098
          %v1114 = vpack.c.b16 %v1101, %v1100
          %v1115 = vpack.c.b16 %v1103, %v1102
          %v1116 = vpack.c.b16 %v1105, %v1104
          %v1117 = vpack.c.b16 %v1107, %v1106
          %v1118 = vpack.c.b16 %v1109, %v1108
          %v1119 = vpack.c.b16 %v1111, %v1110
          %1128 = vmatprep.subr.bf16.mxu0 0
          %1129 = vmatpush1.bf16.msra.mxu0 %v1119
          %1130 = vmatprep.subr.bf16.mxu0 0
          %1131 = vmatpush1.bf16.msra.mxu0 %v1118
          %1132 = vmatprep.subr.bf16.mxu0 0
          %1133 = vmatpush1.bf16.msra.mxu0 %v1117
          %1134 = vmatprep.subr.bf16.mxu0 0
          %1135 = vmatpush1.bf16.msra.mxu0 %v1116
          %1136 = vmatprep.subr.bf16.mxu0 0
          %1137 = vmatpush1.bf16.msra.mxu0 %v1115
          %1138 = vmatprep.subr.bf16.mxu0 0
          %1139 = vmatpush1.bf16.msra.mxu0 %v1114
          %1140 = vmatprep.subr.bf16.mxu0 0
          %1141 = vmatpush1.bf16.msra.mxu0 %v1113
          %1142 = vmatprep.subr.bf16.mxu0 0
          %1143 = vmatpush1.bf16.msra.mxu0 %v1112
          %1144 = vmatprep.subr.bf16.mxu0 0
          %1145 = vmatpush2.bf16.msra.mxu0 0
          %1146 = vmatprep.subr.bf16.mxu0 0
          %1147 = vmatpush2.bf16.msra.mxu0 0
          %1148 = vmatprep.subr.bf16.mxu0 0
          %1149 = vmatpush2.bf16.msra.mxu0 0
          %1150 = vmatprep.subr.bf16.mxu0 0
          %1151 = vmatpush2.bf16.msra.mxu0 0
          %1152 = vmatprep.subr.bf16.mxu0 0
          %1153 = vmatpush2.bf16.msra.mxu0 0
          %1154 = vmatprep.subr.bf16.mxu0 0
          %1155 = vmatpush2.bf16.msra.mxu0 0
          %1156 = vmatprep.subr.bf16.mxu0 0
          %1157 = vmatpush2.bf16.msra.mxu0 0
          %1158 = vmatprep.subr.bf16.mxu0 0
          %1159 = vmatpush2.bf16.msra.mxu0 0
          %1160 = vmatprep.mubr.bf16.mxu0 0
          %1161 = vmatmul.mubr.bf16.gmra.mxu0 %v1056
          %v1162 = vpop.f32.mrf.mxu0
          %v1163 = vadd.f32 %v1078, %v1162
          %v1164 = vpop.f32.mrf.mxu0
          %v1165 = vpop.f32.mrf.mxu0
          %v1166 = vpop.f32.mrf.mxu0
          %1167 = vdwg.mxu0
          %1168 = vst [vmem:[%s463] sm:$0xff] %v1163
        $region72: #{decoder_forward.1} parent=43 // pred_fallthru
          _
        %s1169 = ssub.s32 %s34, 2
        %p1170 = scmp.gt.s32.totalorder %s1169, 0
        %s1171 = scalar_select %p1170, %s1169, 0
        %p1172 = scmp.lt.s32.totalorder %s1171, 0
        %s1173 = scalar_select %p1172, %s1171, 0
        %s1174 = smul.addr %s1173, 8
        %s1175 = scalar_lea.vmem %s8, %s1174
        // Predicated region
        $region73: #{decoder_forward.1} parent=43 // pred_check
          %p1176 = pneg %p224
        $region74: #{decoder_forward.1} parent=43 // pred_check_branch
          %1178 = sbr.rel (%p1176) target = $region76
        $region75: #{decoder_forward.1} parent=43 // pred_region
          %s1179 = ssub.s32 %s34, 2
          %p1180 = scmp.gt.s32.totalorder %s1179, 0
          %s1181 = scalar_select %p1180, %s1179, 0
        $region76: #{decoder_forward.1} parent=43 // pred_fallthru
          _
        // Predicated region
        $region77: #{decoder_forward.1} parent=43 // pred_check
          %p1182 = pneg %p245
        $region78: #{decoder_forward.1} parent=43 // pred_check_branch
          %1184 = sbr.rel (%p1182) target = $region80
        $region79: #{decoder_forward.1} parent=43 // pred_region
          _
        $region80: #{decoder_forward.1} parent=43 // pred_fallthru
          _
        // Predicated region
        $region81: #{decoder_forward.1} parent=43 // pred_check
          %p1185 = pneg %p266
        $region82: #{decoder_forward.1} parent=43 // pred_check_branch
          %1187 = sbr.rel (%p1185) target = $region84
        $region83: #{decoder_forward.1} parent=43 // pred_region
          _
        $region84: #{decoder_forward.1} parent=43 // pred_fallthru
          _
        // Predicated region
        $region85: #{decoder_forward.1} parent=43 // pred_check
          %p1188 = pneg %p245
        $region86: #{decoder_forward.1} parent=43 // pred_check_branch
          %1190 = sbr.rel (%p1188) target = $region88
        $region87: #{decoder_forward.1} parent=43 // pred_region
          _
        $region88: #{decoder_forward.1} parent=43 // pred_fallthru
          _
        // Predicated region
        $region89: #{decoder_forward.1} parent=43 // pred_check
          %p1191 = pneg %p266
        $region90: #{decoder_forward.1} parent=43 // pred_check_branch
          %1193 = sbr.rel (%p1191) target = $region92
        $region91: #{decoder_forward.1} parent=43 // pred_region
          _
        $region92: #{decoder_forward.1} parent=43 // pred_fallthru
          _
      $region44: #{decoder_forward.1} parent=5 // pred_fallthru
        _
      %p1194 = scmp.le.s32.totalorder 2, %s29
      // Predicated region
      $region93: #{decoder_forward.1} parent=5 // pred_check
        %p1195 = pneg %p1194
      $region94: #{decoder_forward.1} parent=5 // pred_check_branch
        %1197 = sbr.rel (%p1195) target = $region96
      $region95: #{decoder_forward.1} parent=5 // pred_region
        %s1198 = ssub.s32 %s29, 2
        // Predicated region
        $region97: #{decoder_forward.1} parent=95 // pred_check
          %p1199 = pneg %p230
        $region98: #{decoder_forward.1} parent=95 // pred_check_branch
          %1201 = sbr.rel (%p1199) target = $region100
        $region99: #{decoder_forward.1} parent=95 // pred_region
          %s1202 = ssub.s32 %s35, 2
          %p1203 = scmp.gt.s32.totalorder %s1202, 0
          %s1204 = scalar_select %p1203, %s1202, 0
          %p1205 = scmp.lt.s32.totalorder %s1204, 0
          %s1206 = scalar_select %p1205, %s1204, 0
          %s1207 = smul.addr %s1206, 8
          %s1208 = scalar_lea.vmem %s8, %s1207
        $region100: #{decoder_forward.1} parent=95 // pred_fallthru
          _
      $region96: #{decoder_forward.1} parent=5 // pred_fallthru
        _
    $region6: #{decoder_forward.1} parent=1 // loop_footer
      %s33 = sadd.s32 1, %s29
    $region7: #{decoder_forward.1} parent=1 // loop_footer_branch
      %28 = sbr.rel target = $region3
    $region8: #{decoder_forward.1} parent=1 // loop_exit
      _
    %1209 = vsyncpa [#allocation8], 1
    %s1210 = scalar_lea.sflag [#allocation8], 1
    %1211 = vsyncpa %s1210, 1
    %1212 = vsyncpa [#allocation10], 1
    %s1213 = scalar_lea.sflag [#allocation10], 1
    %1214 = vsyncpa %s1213, 1
  %1215 = vsyncmov [#allocation4]
  %s1216 = vpop.sfrf %1215
  %p1217 = scmp.eq.s32.totalorder %s1216, 0
  %p1218 = pneg %p1217
  %1220 = shalt.err (%p1218)
  %s1221 = scalar_lea.sflag [#allocation4], 1
  %1222 = vsyncmov %s1221
  %s1223 = vpop.sfrf %1222
  %p1224 = scmp.eq.s32.totalorder %s1223, 0
  %p1225 = pneg %p1224
  %1227 = shalt.err (%p1225)

</llo_original>
